<compile_context>
chip_gen: v5e
topology: v5e:2x2
jax: 0.10.0
libtpu: 0.0.40
codegen_flags: <defaults>
</compile_context>

<pallas_src>
import functools

import jax
import jax.numpy as jnp
from jax import lax
from jax.experimental import pallas as pl
from jax.experimental.pallas import tpu as pltpu


# --------------------------------------------------------------------------
# VMEM limit: derive from the chip instead of hard-coding 64 MiB.
# --------------------------------------------------------------------------
def _vmem_limit_bytes():
    cap = 64 * 1024 * 1024                      # conservative default (v7x physical VMEM)
    try:
        cap = int(getattr(pltpu.get_tpu_info(), "vmem_capacity_bytes", cap)) or cap
    except Exception:
        pass
    return int(min((cap * 3) // 4, 64 * 1024 * 1024))


# --------------------------------------------------------------------------
# In-kernel 3D max pool, kernel=3, stride=2, padding=1 (implicit -inf halo).
# x: (T, H, W, bn, C) with the pooled axes LEADING, so every reshape / slice
# below only touches vreg-row bookkeeping (the (bn, C) sublane/lane tile is
# never re-laid-out).  For even extent D only the LEFT -inf boundary is needed:
#   out[o] = max(x[2o-1], x[2o], x[2o+1]),  x[-1] == -inf,  o in [0, D//2).
# --------------------------------------------------------------------------
def _pool3d_k3s2p1(x):
    def pool_axis(v, axis):
        d = v.shape[axis]
        do = d // 2
        vr = v.reshape(v.shape[:axis] + (do, 2) + v.shape[axis + 1:])
        pre = (slice(None),) * axis
        center = vr[pre + (slice(None), 0)]            # x[2o]
        right = vr[pre + (slice(None), 1)]             # x[2o + 1]
        prev_odd = vr[pre + (slice(0, do - 1), 1)]     # x[2o - 1] for o >= 1
        neg = jnp.full(v.shape[:axis] + (1,) + v.shape[axis + 1:], -jnp.inf, v.dtype)
        left = jnp.concatenate([neg, prev_odd], axis=axis)
        return jnp.maximum(jnp.maximum(center, right), left)

    v = pool_axis(x, 0)   # T
    v = pool_axis(v, 1)   # H
    return pool_axis(v, 2)  # W


def _pool_kernel(x_ref, o_ref):
    o_ref[...] = _pool3d_k3s2p1(x_ref[...]).astype(o_ref.dtype)


def _pool_ln_kernel(x_ref, g_ref, b_ref, o_ref, *, eps):
    # Fused: max-pool then LayerNorm over C on the pooled tile (no extra HBM pass).
    v = _pool3d_k3s2p1(x_ref[...]).astype(jnp.float32)       # (To, Ho, Wo, bn, C)
    mean = jnp.mean(v, axis=-1, keepdims=True)
    vc = v - mean
    var = jnp.mean(vc * vc, axis=-1, keepdims=True)          # biased, like torch LayerNorm
    inv = lax.rsqrt(var + eps)
    o_ref[...] = (vc * inv * g_ref[...] + b_ref[...]).astype(o_ref.dtype)


def _fused_pool_ln(x, gamma, beta, eps):
    """x: (T, H, W, BN, C) -> pooled (To, Ho, Wo, BN, C); LayerNorm fused if gamma given."""
    T, H, W, BN, C = x.shape
    # TODO(synk): odd T/H/W extents (out = (D-1)//2 + 1) are not handled.
    assert T % 2 == 0 and H % 2 == 0 and W % 2 == 0, "even T/H/W expected"
    To, Ho, Wo = T // 2, H // 2, W // 2

    # BN tile: multiples of 8 on the sublane axis when possible (dense sublanes,
    # several parallel grid steps); otherwise the full extent (BlockSpec's
    # second-minor dim must be a multiple of 8 or the full dim).
    bn_tile = 8 if BN % 8 == 0 else BN
    grid = (BN // bn_tile,)

    vmem_limit = _vmem_limit_bytes()
    itemsize = jnp.dtype(x.dtype).itemsize
    in_bytes = T * H * W * BN * C * itemsize
    out_bytes = To * Ho * Wo * BN * C * itemsize

    kernel = (functools.partial(_pool_ln_kernel, eps=eps) if gamma is not None
              else _pool_kernel)
    in_specs = [pl.BlockSpec((T, H, W, bn_tile, C), lambda i: (0, 0, 0, i, 0))]
    args = [x]
    if gamma is not None:
        in_specs += [pl.BlockSpec((1, C), lambda i: (0, 0)),
                     pl.BlockSpec((1, C), lambda i: (0, 0))]
        args += [gamma.reshape(1, C).astype(jnp.float32),
                 beta.reshape(1, C).astype(jnp.float32)]

    return pl.pallas_call(
        kernel,
        out_shape=jax.ShapeDtypeStruct((To, Ho, Wo, BN, C), x.dtype),
        grid=grid,
        in_specs=in_specs,
        out_specs=pl.BlockSpec((To, Ho, Wo, bn_tile, C), lambda i: (0, 0, 0, i, 0)),
        compiler_params=pltpu.CompilerParams(
            dimension_semantics=("parallel",),
            vmem_limit_bytes=vmem_limit),
        cost_estimate=pl.CostEstimate(
            flops=10 * T * H * W * BN * C,
            transcendentals=To * Ho * Wo * BN,
            bytes_accessed=in_bytes + out_bytes + 2 * C * 4),
    )(*args)


# --------------------------------------------------------------------------
# Row-wise LayerNorm kernel.  Only used for the cls-token rows (M = B*N);
# everything else is normalized inside the fused pool kernel, so M is tiny and
# no row padding is needed (the old pad-to-multiple-of-tm HBM copy is gone).
# --------------------------------------------------------------------------
def _layernorm_kernel(x_ref, g_ref, b_ref, o_ref, *, eps):
    x = x_ref[...].astype(jnp.float32)                 # (tm, C)
    mean = jnp.mean(x, axis=-1, keepdims=True)
    xc = x - mean
    var = jnp.mean(xc * xc, axis=-1, keepdims=True)    # biased, like torch LayerNorm
    o_ref[...] = (xc * lax.rsqrt(var + eps) * g_ref[...] + b_ref[...]).astype(o_ref.dtype)


def _layernorm_rows(x2d, gamma, beta, eps):
    M, C = x2d.shape
    tm = 512 if M % 512 == 0 else M                    # 512-row tiles when they divide M
    return pl.pallas_call(
        functools.partial(_layernorm_kernel, eps=eps),
        out_shape=jax.ShapeDtypeStruct((M, C), x2d.dtype),
        grid=(M // tm,),
        in_specs=[pl.BlockSpec((tm, C), lambda i: (i, 0)),
                  pl.BlockSpec((1, C), lambda i: (0, 0)),
                  pl.BlockSpec((1, C), lambda i: (0, 0))],
        out_specs=pl.BlockSpec((tm, C), lambda i: (i, 0)),
        compiler_params=pltpu.CompilerParams(
            dimension_semantics=("parallel",),
            vmem_limit_bytes=_vmem_limit_bytes()),
    )(x2d, gamma.reshape(1, C).astype(jnp.float32),
      beta.reshape(1, C).astype(jnp.float32))


# --------------------------------------------------------------------------
# _AttentionPool.forward equivalent
# --------------------------------------------------------------------------
def attention_pool_pallas(tensor, thw_shape, *, has_pool=True, has_cls_embed=True,
                          gamma=None, beta=None, eps=1e-6):
    """tensor: (B, N, L, C) or (B, L, C); thw_shape: [T, H, W].
    Returns (pooled_tensor, new_thw_shape)."""
    if not has_pool:                                   # pool is None -> identity
        return tensor, thw_shape

    tensor_dim = tensor.ndim
    if tensor_dim == 3:                                # _unsqueeze_dims
        tensor = tensor[:, None]
    elif tensor_dim != 4:
        raise NotImplementedError(f"Unsupported input dimension {tensor.shape}")

    if gamma is not None and beta is None:
        beta = jnp.zeros_like(gamma)

    cls_tok = None
    if has_cls_embed:
        cls_tok, tensor = tensor[:, :, :1, :], tensor[:, :, 1:, :]

    B, N, L, C = tensor.shape
    T, H, W = thw_shape
    assert L == T * H * W, "thw_shape inconsistent with token count"

    # slice + reshape + transpose fuse into a single XLA copy now that the -inf
    # pad and the LayerNorm live inside the kernel.
    # TODO(synk): a native-layout kernel (BN leading, W on sublanes) would drop
    #             this copy too, at the cost of in-kernel sublane de-interleave.
    x = jnp.transpose(tensor.reshape(B * N, T, H, W, C), (1, 2, 3, 0, 4))

    pooled = _fused_pool_ln(x, gamma, beta, eps)       # (To, Ho, Wo, BN, C)
    To, Ho, Wo = pooled.shape[0], pooled.shape[1], pooled.shape[2]
    thw_out = [To, Ho, Wo]
    # transpose + reshape (+ concat below) of the ~8x smaller output fuse in XLA.
    pooled = jnp.transpose(pooled, (3, 0, 1, 2, 4)).reshape(B, N, To * Ho * Wo, C)

    if has_cls_embed:
        if gamma is not None:                          # LN(concat) == concat(LN, LN)
            cls_flat = _layernorm_rows(cls_tok.reshape(B * N, C), gamma, beta, eps)
            cls_tok = cls_flat.reshape(B, N, 1, C).astype(pooled.dtype)
        pooled = jnp.concatenate([cls_tok, pooled], axis=2)

    if tensor_dim == 3:                                # _squeeze_dims
        pooled = pooled[:, 0]
    return pooled, thw_out


# --------------------------------------------------------------------------
# Pure-JAX reference (independent implementation for verification)
# --------------------------------------------------------------------------
def _reference(tensor, thw_shape, gamma, beta, eps, has_cls_embed=True):
    tensor_dim = tensor.ndim
    if tensor_dim == 3:
        tensor = tensor[:, None]
    cls_tok = None
    if has_cls_embed:
        cls_tok, tensor = tensor[:, :, :1, :], tensor[:, :, 1:, :]
    B, N, L, C = tensor.shape
    T, H, W = thw_shape
    x = tensor.reshape(B * N, T, H, W, C)
    pooled = lax.reduce_window(
        x, -jnp.inf, lax.max,
        window_dimensions=(1, 3, 3, 3, 1),
        window_strides=(1, 2, 2, 2, 1),
        padding=((0, 0), (1, 1), (1, 1), (1, 1), (0, 0)))
    To, Ho, Wo = pooled.shape[1:4]
    pooled = pooled.reshape(B, N, To * Ho * Wo, C)
    if has_cls_embed:
        pooled = jnp.concatenate([cls_tok, pooled], axis=2)
    mean = pooled.mean(-1, keepdims=True)
    var = ((pooled - mean) ** 2).mean(-1, keepdims=True)
    out = (pooled - mean) * lax.rsqrt(var + eps) * gamma + beta
    if tensor_dim == 3:
        out = out[:, 0]
    return out, [int(To), int(Ho), int(Wo)]


if __name__ == "__main__":
    # Small shapes consistent with an MViT attention-pool block.
    B, N = 2, 2                 # batch, heads
    T, H, W = 4, 8, 8           # spatial shape before flattening
    C = 128                     # head dim (lane-dense)
    thw_shape = [T, H, W]
    L = 1 + T * H * W           # cls token + spatial tokens
    eps = 1e-6                  # MViT LayerNorm eps

    key = jax.random.PRNGKey(0)
    kx, kg, kb, kx3 = jax.random.split(key, 4)
    x = jax.random.normal(kx, (B, N, L, C), dtype=jnp.float32)
    gamma = 1.0 + 0.1 * jax.random.normal(kg, (C,), dtype=jnp.float32)
    beta = 0.1 * jax.random.normal(kb, (C,), dtype=jnp.float32)

    # (B, N, L, C) path
    out, thw_out = attention_pool_pallas(x, thw_shape, has_cls_embed=True,
                                         gamma=gamma, beta=beta, eps=eps)
    out = jax.block_until_ready(out)
    ref, thw_ref = _reference(x, thw_shape, gamma, beta, eps, has_cls_embed=True)
    assert list(thw_out) == list(thw_ref), "thw_shape mismatch"
    assert out.shape == ref.shape, "shape mismatch"
    assert jnp.allclose(out, ref, atol=1e-5, rtol=1e-5), "mismatch vs reference"

    # (B, L, C) path (exercises the _unsqueeze/_squeeze handling)
    x3 = jax.random.normal(kx3, (B, L, C), dtype=jnp.float32)
    out3, thw3 = attention_pool_pallas(x3, thw_shape, has_cls_embed=True,
                                       gamma=gamma, beta=beta, eps=eps)
    out3 = jax.block_until_ready(out3)
    ref3, thw_ref3 = _reference(x3, thw_shape, gamma, beta, eps, has_cls_embed=True)
    assert list(thw3) == list(thw_ref3), "thw_shape mismatch (3D path)"
    assert out3.shape == ref3.shape, "shape mismatch (3D path)"
    assert jnp.allclose(out3, ref3, atol=1e-5, rtol=1e-5), "mismatch vs reference (3D path)"

    print("KERNEL_OK")
</pallas_src>

<mosaic_0001>
module attributes {stable_mosaic.version = 11 : i64} {
  func.func @_pool_ln_kernel(%arg0: i32, %arg1: memref<4x8x8x4x128xf32, #tpu.memory_space<vmem>>, %arg2: memref<1x128xf32, #tpu.memory_space<vmem>>, %arg3: memref<1x128xf32, #tpu.memory_space<vmem>>, %arg4: memref<2x4x4x4x128xf32, #tpu.memory_space<vmem>>) attributes {dimension_semantics = [#tpu.dimension_semantics<parallel>], iteration_bounds = array<i64: 1>, scalar_prefetch = 0 : i64, scratch_operands = 0 : i64, tpu.core_type = #tpu.core_type<tc>, window_params = [{transform_indices = @transform_0, window_bounds = array<i64: 4, 8, 8, 4, 128>}, {pipeline_mode = #tpu.pipeline_mode<synchronous>, transform_indices = @transform_1, window_bounds = array<i64: 1, 128>}, {pipeline_mode = #tpu.pipeline_mode<synchronous>, transform_indices = @transform_2, window_bounds = array<i64: 1, 128>}, {transform_indices = @transform_3, window_bounds = array<i64: 2, 4, 4, 4, 128>}]} {
    %c0 = arith.constant 0 : index
    %c0_0 = arith.constant 0 : index
    %c0_1 = arith.constant 0 : index
    %c0_2 = arith.constant 0 : index
    %c0_3 = arith.constant 0 : index
    %0 = vector.load %arg1[%c0, %c0_0, %c0_1, %c0_2, %c0_3] : memref<4x8x8x4x128xf32, #tpu.memory_space<vmem>>, vector<4x8x8x4x128xf32>
    %1 = vector.shape_cast %0 : vector<4x8x8x4x128xf32> to vector<2x2x8x8x4x128xf32>
    %2 = vector.extract_strided_slice %1 {offsets = [0, 0, 0, 0, 0, 0], sizes = [2, 1, 8, 8, 4, 128], strides = [1, 1, 1, 1, 1, 1]} : vector<2x2x8x8x4x128xf32> to vector<2x1x8x8x4x128xf32>
    %3 = vector.shape_cast %2 : vector<2x1x8x8x4x128xf32> to vector<2x8x8x4x128xf32>
    %4 = vector.extract_strided_slice %1 {offsets = [0, 1, 0, 0, 0, 0], sizes = [2, 1, 8, 8, 4, 128], strides = [1, 1, 1, 1, 1, 1]} : vector<2x2x8x8x4x128xf32> to vector<2x1x8x8x4x128xf32>
    %5 = vector.shape_cast %4 : vector<2x1x8x8x4x128xf32> to vector<2x8x8x4x128xf32>
    %6 = vector.extract_strided_slice %1 {offsets = [0, 1, 0, 0, 0, 0], sizes = [1, 1, 8, 8, 4, 128], strides = [1, 1, 1, 1, 1, 1]} : vector<2x2x8x8x4x128xf32> to vector<1x1x8x8x4x128xf32>
    %7 = vector.shape_cast %6 : vector<1x1x8x8x4x128xf32> to vector<1x8x8x4x128xf32>
    %cst = arith.constant 0xFF800000 : f32
    %8 = vector.broadcast %cst : f32 to vector<1x8x8x4x128xf32>
    %9 = tpu.concatenate %8, %7 in 0 : vector<1x8x8x4x128xf32>, vector<1x8x8x4x128xf32> -> vector<2x8x8x4x128xf32>
    %10 = arith.maximumf %3, %5 : vector<2x8x8x4x128xf32>
    %11 = arith.maximumf %10, %9 : vector<2x8x8x4x128xf32>
    %12 = vector.shape_cast %11 : vector<2x8x8x4x128xf32> to vector<2x4x2x8x4x128xf32>
    %13 = vector.extract_strided_slice %12 {offsets = [0, 0, 0, 0, 0, 0], sizes = [2, 4, 1, 8, 4, 128], strides = [1, 1, 1, 1, 1, 1]} : vector<2x4x2x8x4x128xf32> to vector<2x4x1x8x4x128xf32>
    %14 = vector.shape_cast %13 : vector<2x4x1x8x4x128xf32> to vector<2x4x8x4x128xf32>
    %15 = vector.extract_strided_slice %12 {offsets = [0, 0, 1, 0, 0, 0], sizes = [2, 4, 1, 8, 4, 128], strides = [1, 1, 1, 1, 1, 1]} : vector<2x4x2x8x4x128xf32> to vector<2x4x1x8x4x128xf32>
    %16 = vector.shape_cast %15 : vector<2x4x1x8x4x128xf32> to vector<2x4x8x4x128xf32>
    %17 = vector.extract_strided_slice %12 {offsets = [0, 0, 1, 0, 0, 0], sizes = [2, 3, 1, 8, 4, 128], strides = [1, 1, 1, 1, 1, 1]} : vector<2x4x2x8x4x128xf32> to vector<2x3x1x8x4x128xf32>
    %18 = vector.shape_cast %17 : vector<2x3x1x8x4x128xf32> to vector<2x3x8x4x128xf32>
    %cst_4 = arith.constant 0xFF800000 : f32
    %19 = vector.broadcast %cst_4 : f32 to vector<2x1x8x4x128xf32>
    %20 = tpu.concatenate %19, %18 in 1 : vector<2x1x8x4x128xf32>, vector<2x3x8x4x128xf32> -> vector<2x4x8x4x128xf32>
    %21 = arith.maximumf %14, %16 : vector<2x4x8x4x128xf32>
    %22 = arith.maximumf %21, %20 : vector<2x4x8x4x128xf32>
    %23 = vector.shape_cast %22 : vector<2x4x8x4x128xf32> to vector<2x4x4x2x4x128xf32>
    %24 = vector.extract_strided_slice %23 {offsets = [0, 0, 0, 0, 0, 0], sizes = [2, 4, 4, 1, 4, 128], strides = [1, 1, 1, 1, 1, 1]} : vector<2x4x4x2x4x128xf32> to vector<2x4x4x1x4x128xf32>
    %25 = vector.shape_cast %24 : vector<2x4x4x1x4x128xf32> to vector<2x4x4x4x128xf32>
    %26 = vector.extract_strided_slice %23 {offsets = [0, 0, 0, 1, 0, 0], sizes = [2, 4, 4, 1, 4, 128], strides = [1, 1, 1, 1, 1, 1]} : vector<2x4x4x2x4x128xf32> to vector<2x4x4x1x4x128xf32>
    %27 = vector.shape_cast %26 : vector<2x4x4x1x4x128xf32> to vector<2x4x4x4x128xf32>
    %28 = vector.extract_strided_slice %23 {offsets = [0, 0, 0, 1, 0, 0], sizes = [2, 4, 3, 1, 4, 128], strides = [1, 1, 1, 1, 1, 1]} : vector<2x4x4x2x4x128xf32> to vector<2x4x3x1x4x128xf32>
    %29 = vector.shape_cast %28 : vector<2x4x3x1x4x128xf32> to vector<2x4x3x4x128xf32>
    %cst_5 = arith.constant 0xFF800000 : f32
    %30 = vector.broadcast %cst_5 : f32 to vector<2x4x1x4x128xf32>
    %31 = tpu.concatenate %30, %29 in 2 : vector<2x4x1x4x128xf32>, vector<2x4x3x4x128xf32> -> vector<2x4x4x4x128xf32>
    %32 = arith.maximumf %25, %27 : vector<2x4x4x4x128xf32>
    %33 = arith.maximumf %32, %31 : vector<2x4x4x4x128xf32>
    %cst_6 = arith.constant dense<0.000000e+00> : vector<2x4x4x4xf32>
    %34 = vector.multi_reduction <add>, %33, %cst_6 [4] : vector<2x4x4x4x128xf32> to vector<2x4x4x4xf32>
    %35 = vector.shape_cast %34 : vector<2x4x4x4xf32> to vector<2x4x4x4x1xf32>
    %cst_7 = arith.constant 1.280000e+02 : f32
    %36 = vector.broadcast %cst_7 : f32 to vector<2x4x4x4x1xf32>
    %37 = arith.divf %35, %36 : vector<2x4x4x4x1xf32>
    %38 = vector.broadcast %37 : vector<2x4x4x4x1xf32> to vector<2x4x4x4x128xf32>
    %39 = arith.subf %33, %38 : vector<2x4x4x4x128xf32>
    %40 = arith.mulf %39, %39 : vector<2x4x4x4x128xf32>
    %cst_8 = arith.constant dense<0.000000e+00> : vector<2x4x4x4xf32>
    %41 = vector.multi_reduction <add>, %40, %cst_8 [4] : vector<2x4x4x4x128xf32> to vector<2x4x4x4xf32>
    %42 = vector.shape_cast %41 : vector<2x4x4x4xf32> to vector<2x4x4x4x1xf32>
    %cst_9 = arith.constant 1.280000e+02 : f32
    %43 = vector.broadcast %cst_9 : f32 to vector<2x4x4x4x1xf32>
    %44 = arith.divf %42, %43 : vector<2x4x4x4x1xf32>
    %cst_10 = arith.constant 9.99999997E-7 : f32
    %45 = vector.broadcast %cst_10 : f32 to vector<2x4x4x4x1xf32>
    %46 = arith.addf %44, %45 : vector<2x4x4x4x1xf32>
    %47 = math.rsqrt %46 : vector<2x4x4x4x1xf32>
    %48 = vector.broadcast %47 : vector<2x4x4x4x1xf32> to vector<2x4x4x4x128xf32>
    %49 = arith.mulf %39, %48 : vector<2x4x4x4x128xf32>
    %c0_11 = arith.constant 0 : index
    %c0_12 = arith.constant 0 : index
    %50 = vector.load %arg2[%c0_11, %c0_12] : memref<1x128xf32, #tpu.memory_space<vmem>>, vector<1x128xf32>
    %51 = vector.shape_cast %50 : vector<1x128xf32> to vector<1x1x1x1x128xf32>
    %52 = vector.broadcast %51 : vector<1x1x1x1x128xf32> to vector<2x4x4x4x128xf32>
    %53 = arith.mulf %49, %52 : vector<2x4x4x4x128xf32>
    %c0_13 = arith.constant 0 : index
    %c0_14 = arith.constant 0 : index
    %54 = vector.load %arg3[%c0_13, %c0_14] : memref<1x128xf32, #tpu.memory_space<vmem>>, vector<1x128xf32>
    %55 = vector.shape_cast %54 : vector<1x128xf32> to vector<1x1x1x1x128xf32>
    %56 = vector.broadcast %55 : vector<1x1x1x1x128xf32> to vector<2x4x4x4x128xf32>
    %57 = arith.addf %53, %56 : vector<2x4x4x4x128xf32>
    %c0_15 = arith.constant 0 : index
    %c0_16 = arith.constant 0 : index
    %c0_17 = arith.constant 0 : index
    %c0_18 = arith.constant 0 : index
    %c0_19 = arith.constant 0 : index
    %58 = vector.load %arg4[%c0_15, %c0_16, %c0_17, %c0_18, %c0_19] : memref<2x4x4x4x128xf32, #tpu.memory_space<vmem>>, vector<2x4x4x4x128xf32>
    tpu.vector_store %arg4[%c0_15, %c0_16, %c0_17, %c0_18, %c0_19], %57 {strides = array<i32>} : memref<2x4x4x4x128xf32, #tpu.memory_space<vmem>>, vector<2x4x4x4x128xf32>,
    return
  }
  func.func @transform_0(%arg0: i32) -> (i32, i32, i32, i32, i32) {
    %c0_i32 = arith.constant 0 : i32
    %c0_i32_0 = arith.constant 0 : i32
    %c0_i32_1 = arith.constant 0 : i32
    %c0_i32_2 = arith.constant 0 : i32
    %c0_i32_3 = arith.constant 0 : i32
    return %c0_i32, %c0_i32_0, %c0_i32_1, %arg0, %c0_i32_2 : i32, i32, i32, i32, i32
  }
  func.func @transform_1(%arg0: i32) -> (i32, i32) {
    %c0_i32 = arith.constant 0 : i32
    %c0_i32_0 = arith.constant 0 : i32
    %c0_i32_1 = arith.constant 0 : i32
    return %c0_i32, %c0_i32_0 : i32, i32
  }
  func.func @transform_2(%arg0: i32) -> (i32, i32) {
    %c0_i32 = arith.constant 0 : i32
    %c0_i32_0 = arith.constant 0 : i32
    %c0_i32_1 = arith.constant 0 : i32
    return %c0_i32, %c0_i32_0 : i32, i32
  }
  func.func @transform_3(%arg0: i32) -> (i32, i32, i32, i32, i32) {
    %c0_i32 = arith.constant 0 : i32
    %c0_i32_0 = arith.constant 0 : i32
    %c0_i32_1 = arith.constant 0 : i32
    %c0_i32_2 = arith.constant 0 : i32
    %c0_i32_3 = arith.constant 0 : i32
    return %c0_i32, %c0_i32_0, %c0_i32_1, %arg0, %c0_i32_2 : i32, i32, i32, i32, i32
  }
}

</mosaic_0001>

<llo_original>
// kernel: tpu_custom_call.1
$region0: #{tpu_custom_call.1}
  #allocation0 [shape = 'u32[]', space=smem, size = 0x4, offset = 0x4, fixed_abs, tag = 'smem constant byte address 0x4 - core index']
  #allocation1 [shape = 'u32[72,128]{1,0:T(1,128)}', space=vmem, size = 0x9000, scoped, tag = 'internal scratch']
  %s0 = inlined_call_operand.hbm [shape: f32[4,8,8,4,128], index: 0, kind: input, shape index: {}]
  %s1 = inlined_call_operand.hbm [shape: f32[1,128], index: 1, kind: input, shape index: {}]
  %s2 = inlined_call_operand.vmem [shape: f32[1,128], index: 2, kind: input, shape index: {}]
  %s3 = inlined_call_operand.hbm [shape: f32[2,4,4,4,128], index: 3, kind: output, shape index: {}]
  %s4 = sld [smem:[#allocation0]]
  $region30: #{tpu_custom_call.1} parent=0
    _
  %s6 = ssub.s32 1, %s4
  %s7 = scalar_select 0, %s6, %s4
  $region1: #{tpu_custom_call.1} parent=0
    #allocation2 [shape = 'u8[524288]{0}', space=vmem, size = 0x80000, scoped, tag = 'input window, operand 0, single buffered']
    #allocation3 [shape = 's32[1]{0}', space=sflag, size = 0x4, scoped, tag = 'scoped memory for tpu_custom_call.1']
    #allocation4 [shape = 's32[1]{0}', space=sflag, size = 0x4, scoped, tag = 'scoped memory for tpu_custom_call.1']
    #allocation5 [shape = 'u8[512]{0}', space=vmem, size = 0x400, scoped, tag = 'input window, operand 1, single buffered']
    #allocation6 [shape = 's32[1]{0}', space=sflag, size = 0x4, scoped, tag = 'scoped memory for tpu_custom_call.1']
    #allocation7 [shape = 'u8[65536]{0}', space=vmem, size = 0x10000, scoped, tag = 'output window, operand 0, single buffered']
    %8 = vsyncpa [#allocation3], 0
    %9 = vsyncpa [#allocation6], 0
    %10 = vsyncpa [#allocation4], 0
    // Predicated region
    $region2: #{tpu_custom_call.1} parent=1 // pred_check
      _
    $region3: #{tpu_custom_call.1} parent=1 // pred_check_branch
      %12 = sbr.rel (0) target = $region5
    $region4: #{tpu_custom_call.1} parent=1 // pred_region
      %14 = vsyncadd [#allocation3], 0
      %s15 = sshll.u32 %s0, 4
      %s16 = int_to_ptr.hbm [resolvable:$true] %s15
      %s17 = sshll.u32 [#allocation2], 4
      %s18 = int_to_ptr.vmem [resolvable:$true] %s17
      %23 = dma.hbm_to_vmem [thread:$0]  %s16, 16384, %s18, [#allocation3], 64, 64, 4
    $region5: #{tpu_custom_call.1} parent=1 // pred_fallthru
      _
    // Predicated region
    $region6: #{tpu_custom_call.1} parent=1 // pred_check
      _
    $region7: #{tpu_custom_call.1} parent=1 // pred_check_branch
      %25 = sbr.rel (0) target = $region9
    $region8: #{tpu_custom_call.1} parent=1 // pred_region
      %27 = vsyncadd [#allocation6], 0
      %s29 = sshll.u32 %s1, 4
      %s30 = int_to_ptr.hbm [resolvable:$true] %s29
      %s31 = sshll.u32 [#allocation5], 4
      %s32 = int_to_ptr.vmem [resolvable:$true] %s31
      %34 = dma.hbm_to_vmem [thread:$0]  %s30, 16, %s32, [#allocation6]
    $region9: #{tpu_custom_call.1} parent=1 // pred_fallthru
      _
    // Predicated region
    $region10: #{tpu_custom_call.1} parent=1 // pred_check
      _
    $region11: #{tpu_custom_call.1} parent=1 // pred_check_branch
      %36 = sbr.rel (0) target = $region13
    $region12: #{tpu_custom_call.1} parent=1 // pred_region
      _
    $region13: #{tpu_custom_call.1} parent=1 // pred_fallthru
      _
    // Predicated region
    $region14: #{tpu_custom_call.1} parent=1 // pred_check
      _
    $region15: #{tpu_custom_call.1} parent=1 // pred_check_branch
      %38 = sbr.rel (0) target = $region17
    $region16: #{tpu_custom_call.1} parent=1 // pred_region
      %40 = dma.done [#allocation3], 16384
    $region17: #{tpu_custom_call.1} parent=1 // pred_fallthru
      _
    // Predicated region
    $region18: #{tpu_custom_call.1} parent=1 // pred_check
      _
    $region19: #{tpu_custom_call.1} parent=1 // pred_check_branch
      %42 = sbr.rel (0) target = $region21
    $region20: #{tpu_custom_call.1} parent=1 // pred_region
      %44 = dma.done [#allocation6], 16
    $region21: #{tpu_custom_call.1} parent=1 // pred_fallthru
      _
    %v45 = vld [vmem:[#allocation2] sm:$0xf]
    %v46 = vld [vmem:[#allocation2 + $0x4] sm:$0xf]
    %v47 = vld [vmem:[#allocation2 + $0x8] sm:$0xf]
    %v48 = vld [vmem:[#allocation2 + $0xc] sm:$0xf]
    %v49 = vld [vmem:[#allocation2 + $0x10] sm:$0xf]
    %v50 = vld [vmem:[#allocation2 + $0x14] sm:$0xf]
    %v51 = vld [vmem:[#allocation2 + $0x18] sm:$0xf]
    %v52 = vld [vmem:[#allocation2 + $0x1c] sm:$0xf]
    %v53 = vld [vmem:[#allocation2 + $0x20] sm:$0xf]
    %v54 = vld [vmem:[#allocation2 + $0x24] sm:$0xf]
    %v55 = vld [vmem:[#allocation2 + $0x28] sm:$0xf]
    %v56 = vld [vmem:[#allocation2 + $0x2c] sm:$0xf]
    %v57 = vld [vmem:[#allocation2 + $0x30] sm:$0xf]
    %v58 = vld [vmem:[#allocation2 + $0x34] sm:$0xf]
    %v59 = vld [vmem:[#allocation2 + $0x38] sm:$0xf]
    %v60 = vld [vmem:[#allocation2 + $0x3c] sm:$0xf]
    %v61 = vld [vmem:[#allocation2 + $0x40] sm:$0xf]
    %v62 = vld [vmem:[#allocation2 + $0x44] sm:$0xf]
    %v63 = vld [vmem:[#allocation2 + $0x48] sm:$0xf]
    %v64 = vld [vmem:[#allocation2 + $0x4c] sm:$0xf]
    %v65 = vld [vmem:[#allocation2 + $0x50] sm:$0xf]
    %v66 = vld [vmem:[#allocation2 + $0x54] sm:$0xf]
    %v67 = vld [vmem:[#allocation2 + $0x58] sm:$0xf]
    %v68 = vld [vmem:[#allocation2 + $0x5c] sm:$0xf]
    %v69 = vld [vmem:[#allocation2 + $0x60] sm:$0xf]
    %v70 = vld [vmem:[#allocation2 + $0x64] sm:$0xf]
    %v71 = vld [vmem:[#allocation2 + $0x68] sm:$0xf]
    %v72 = vld [vmem:[#allocation2 + $0x6c] sm:$0xf]
    %v73 = vld [vmem:[#allocation2 + $0x70] sm:$0xf]
    %v74 = vld [vmem:[#allocation2 + $0x74] sm:$0xf]
    %v75 = vld [vmem:[#allocation2 + $0x78] sm:$0xf]
    %v76 = vld [vmem:[#allocation2 + $0x7c] sm:$0xf]
    %v77 = vld [vmem:[#allocation2 + $0x80] sm:$0xf]
    %v78 = vld [vmem:[#allocation2 + $0x84] sm:$0xf]
    %v79 = vld [vmem:[#allocation2 + $0x88] sm:$0xf]
    %v80 = vld [vmem:[#allocation2 + $0x8c] sm:$0xf]
    %v81 = vld [vmem:[#allocation2 + $0x90] sm:$0xf]
    %v82 = vld [vmem:[#allocation2 + $0x94] sm:$0xf]
    %v83 = vld [vmem:[#allocation2 + $0x98] sm:$0xf]
    %v84 = vld [vmem:[#allocation2 + $0x9c] sm:$0xf]
    %v85 = vld [vmem:[#allocation2 + $0xa0] sm:$0xf]
    %v86 = vld [vmem:[#allocation2 + $0xa4] sm:$0xf]
    %v87 = vld [vmem:[#allocation2 + $0xa8] sm:$0xf]
    %v88 = vld [vmem:[#allocation2 + $0xac] sm:$0xf]
    %v89 = vld [vmem:[#allocation2 + $0xb0] sm:$0xf]
    %v90 = vld [vmem:[#allocation2 + $0xb4] sm:$0xf]
    %v91 = vld [vmem:[#allocation2 + $0xb8] sm:$0xf]
    %v92 = vld [vmem:[#allocation2 + $0xbc] sm:$0xf]
    %v93 = vld [vmem:[#allocation2 + $0xc0] sm:$0xf]
    %v94 = vld [vmem:[#allocation2 + $0xc4] sm:$0xf]
    %v95 = vld [vmem:[#allocation2 + $0xc8] sm:$0xf]
    %v96 = vld [vmem:[#allocation2 + $0xcc] sm:$0xf]
    %v97 = vld [vmem:[#allocation2 + $0xd0] sm:$0xf]
    %v98 = vld [vmem:[#allocation2 + $0xd4] sm:$0xf]
    %v99 = vld [vmem:[#allocation2 + $0xd8] sm:$0xf]
    %v100 = vld [vmem:[#allocation2 + $0xdc] sm:$0xf]
    %v101 = vld [vmem:[#allocation2 + $0xe0] sm:$0xf]
    %v102 = vld [vmem:[#allocation2 + $0xe4] sm:$0xf]
    %v103 = vld [vmem:[#allocation2 + $0xe8] sm:$0xf]
    %v104 = vld [vmem:[#allocation2 + $0xec] sm:$0xf]
    %v105 = vld [vmem:[#allocation2 + $0xf0] sm:$0xf]
    %v106 = vld [vmem:[#allocation2 + $0xf4] sm:$0xf]
    %v107 = vld [vmem:[#allocation2 + $0xf8] sm:$0xf]
    %v108 = vld [vmem:[#allocation2 + $0xfc] sm:$0xf]
    %v109 = vld [vmem:[#allocation2 + $0x100] sm:$0xf]
    %v110 = vld [vmem:[#allocation2 + $0x104] sm:$0xf]
    %v111 = vld [vmem:[#allocation2 + $0x108] sm:$0xf]
    %v112 = vld [vmem:[#allocation2 + $0x10c] sm:$0xf]
    %v113 = vld [vmem:[#allocation2 + $0x110] sm:$0xf]
    %v114 = vld [vmem:[#allocation2 + $0x114] sm:$0xf]
    %v115 = vld [vmem:[#allocation2 + $0x118] sm:$0xf]
    %v116 = vld [vmem:[#allocation2 + $0x11c] sm:$0xf]
    %v117 = vld [vmem:[#allocation2 + $0x120] sm:$0xf]
    %v118 = vld [vmem:[#allocation2 + $0x124] sm:$0xf]
    %v119 = vld [vmem:[#allocation2 + $0x128] sm:$0xf]
    %v120 = vld [vmem:[#allocation2 + $0x12c] sm:$0xf]
    %v121 = vld [vmem:[#allocation2 + $0x130] sm:$0xf]
    %v122 = vld [vmem:[#allocation2 + $0x134] sm:$0xf]
    %v123 = vld [vmem:[#allocation2 + $0x138] sm:$0xf]
    %v124 = vld [vmem:[#allocation2 + $0x13c] sm:$0xf]
    %v125 = vld [vmem:[#allocation2 + $0x140] sm:$0xf]
    %v126 = vld [vmem:[#allocation2 + $0x144] sm:$0xf]
    %v127 = vld [vmem:[#allocation2 + $0x148] sm:$0xf]
    %v128 = vld [vmem:[#allocation2 + $0x14c] sm:$0xf]
    %v129 = vld [vmem:[#allocation2 + $0x150] sm:$0xf]
    %v130 = vld [vmem:[#allocation2 + $0x154] sm:$0xf]
    %v131 = vld [vmem:[#allocation2 + $0x158] sm:$0xf]
    %v132 = vld [vmem:[#allocation2 + $0x15c] sm:$0xf]
    %v133 = vld [vmem:[#allocation2 + $0x160] sm:$0xf]
    %v134 = vld [vmem:[#allocation2 + $0x164] sm:$0xf]
    %v135 = vld [vmem:[#allocation2 + $0x168] sm:$0xf]
    %v136 = vld [vmem:[#allocation2 + $0x16c] sm:$0xf]
    %v137 = vld [vmem:[#allocation2 + $0x170] sm:$0xf]
    %v138 = vld [vmem:[#allocation2 + $0x174] sm:$0xf]
    %v139 = vld [vmem:[#allocation2 + $0x178] sm:$0xf]
    %v140 = vld [vmem:[#allocation2 + $0x17c] sm:$0xf]
    %v141 = vld [vmem:[#allocation2 + $0x180] sm:$0xf]
    %v142 = vld [vmem:[#allocation2 + $0x184] sm:$0xf]
    %v143 = vld [vmem:[#allocation2 + $0x188] sm:$0xf]
    %v144 = vld [vmem:[#allocation2 + $0x18c] sm:$0xf]
    %v145 = vld [vmem:[#allocation2 + $0x190] sm:$0xf]
    %v146 = vld [vmem:[#allocation2 + $0x194] sm:$0xf]
    %v147 = vld [vmem:[#allocation2 + $0x198] sm:$0xf]
    %v148 = vld [vmem:[#allocation2 + $0x19c] sm:$0xf]
    %v149 = vld [vmem:[#allocation2 + $0x1a0] sm:$0xf]
    %v150 = vld [vmem:[#allocation2 + $0x1a4] sm:$0xf]
    %v151 = vld [vmem:[#allocation2 + $0x1a8] sm:$0xf]
    %v152 = vld [vmem:[#allocation2 + $0x1ac] sm:$0xf]
    %v153 = vld [vmem:[#allocation2 + $0x1b0] sm:$0xf]
    %v154 = vld [vmem:[#allocation2 + $0x1b4] sm:$0xf]
    %v155 = vld [vmem:[#allocation2 + $0x1b8] sm:$0xf]
    %v156 = vld [vmem:[#allocation2 + $0x1bc] sm:$0xf]
    %v157 = vld [vmem:[#allocation2 + $0x1c0] sm:$0xf]
    %v158 = vld [vmem:[#allocation2 + $0x1c4] sm:$0xf]
    %v159 = vld [vmem:[#allocation2 + $0x1c8] sm:$0xf]
    %v160 = vld [vmem:[#allocation2 + $0x1cc] sm:$0xf]
    %v161 = vld [vmem:[#allocation2 + $0x1d0] sm:$0xf]
    %v162 = vld [vmem:[#allocation2 + $0x1d4] sm:$0xf]
    %v163 = vld [vmem:[#allocation2 + $0x1d8] sm:$0xf]
    %v164 = vld [vmem:[#allocation2 + $0x1dc] sm:$0xf]
    %v165 = vld [vmem:[#allocation2 + $0x1e0] sm:$0xf]
    %v166 = vld [vmem:[#allocation2 + $0x1e4] sm:$0xf]
    %v167 = vld [vmem:[#allocation2 + $0x1e8] sm:$0xf]
    %v168 = vld [vmem:[#allocation2 + $0x1ec] sm:$0xf]
    %v169 = vld [vmem:[#allocation2 + $0x1f0] sm:$0xf]
    %v170 = vld [vmem:[#allocation2 + $0x1f4] sm:$0xf]
    %v171 = vld [vmem:[#allocation2 + $0x1f8] sm:$0xf]
    %v172 = vld [vmem:[#allocation2 + $0x1fc] sm:$0xf]
    %v173 = vld [vmem:[#allocation2 + $0x200] sm:$0xf]
    %v174 = vld [vmem:[#allocation2 + $0x204] sm:$0xf]
    %v175 = vld [vmem:[#allocation2 + $0x208] sm:$0xf]
    %v176 = vld [vmem:[#allocation2 + $0x20c] sm:$0xf]
    %v177 = vld [vmem:[#allocation2 + $0x210] sm:$0xf]
    %v178 = vld [vmem:[#allocation2 + $0x214] sm:$0xf]
    %v179 = vld [vmem:[#allocation2 + $0x218] sm:$0xf]
    %v180 = vld [vmem:[#allocation2 + $0x21c] sm:$0xf]
    %v181 = vld [vmem:[#allocation2 + $0x220] sm:$0xf]
    %v182 = vld [vmem:[#allocation2 + $0x224] sm:$0xf]
    %v183 = vld [vmem:[#allocation2 + $0x228] sm:$0xf]
    %v184 = vld [vmem:[#allocation2 + $0x22c] sm:$0xf]
    %v185 = vld [vmem:[#allocation2 + $0x230] sm:$0xf]
    %v186 = vld [vmem:[#allocation2 + $0x234] sm:$0xf]
    %v187 = vld [vmem:[#allocation2 + $0x238] sm:$0xf]
    %v188 = vld [vmem:[#allocation2 + $0x23c] sm:$0xf]
    %v189 = vld [vmem:[#allocation2 + $0x240] sm:$0xf]
    %v190 = vld [vmem:[#allocation2 + $0x244] sm:$0xf]
    %v191 = vld [vmem:[#allocation2 + $0x248] sm:$0xf]
    %v192 = vld [vmem:[#allocation2 + $0x24c] sm:$0xf]
    %v193 = vld [vmem:[#allocation2 + $0x250] sm:$0xf]
    %v194 = vld [vmem:[#allocation2 + $0x254] sm:$0xf]
    %v195 = vld [vmem:[#allocation2 + $0x258] sm:$0xf]
    %v196 = vld [vmem:[#allocation2 + $0x25c] sm:$0xf]
    %v197 = vld [vmem:[#allocation2 + $0x260] sm:$0xf]
    %v198 = vld [vmem:[#allocation2 + $0x264] sm:$0xf]
    %v199 = vld [vmem:[#allocation2 + $0x268] sm:$0xf]
    %v200 = vld [vmem:[#allocation2 + $0x26c] sm:$0xf]
    %v201 = vld [vmem:[#allocation2 + $0x270] sm:$0xf]
    %v202 = vld [vmem:[#allocation2 + $0x274] sm:$0xf]
    %v203 = vld [vmem:[#allocation2 + $0x278] sm:$0xf]
    %v204 = vld [vmem:[#allocation2 + $0x27c] sm:$0xf]
    %v205 = vld [vmem:[#allocation2 + $0x280] sm:$0xf]
    %v206 = vld [vmem:[#allocation2 + $0x284] sm:$0xf]
    %v207 = vld [vmem:[#allocation2 + $0x288] sm:$0xf]
    %v208 = vld [vmem:[#allocation2 + $0x28c] sm:$0xf]
    %v209 = vld [vmem:[#allocation2 + $0x290] sm:$0xf]
    %v210 = vld [vmem:[#allocation2 + $0x294] sm:$0xf]
    %v211 = vld [vmem:[#allocation2 + $0x298] sm:$0xf]
    %v212 = vld [vmem:[#allocation2 + $0x29c] sm:$0xf]
    %v213 = vld [vmem:[#allocation2 + $0x2a0] sm:$0xf]
    %v214 = vld [vmem:[#allocation2 + $0x2a4] sm:$0xf]
    %v215 = vld [vmem:[#allocation2 + $0x2a8] sm:$0xf]
    %v216 = vld [vmem:[#allocation2 + $0x2ac] sm:$0xf]
    %v217 = vld [vmem:[#allocation2 + $0x2b0] sm:$0xf]
    %v218 = vld [vmem:[#allocation2 + $0x2b4] sm:$0xf]
    %v219 = vld [vmem:[#allocation2 + $0x2b8] sm:$0xf]
    %v220 = vld [vmem:[#allocation2 + $0x2bc] sm:$0xf]
    %v221 = vld [vmem:[#allocation2 + $0x2c0] sm:$0xf]
    %v222 = vld [vmem:[#allocation2 + $0x2c4] sm:$0xf]
    %v223 = vld [vmem:[#allocation2 + $0x2c8] sm:$0xf]
    %v224 = vld [vmem:[#allocation2 + $0x2cc] sm:$0xf]
    %v225 = vld [vmem:[#allocation2 + $0x2d0] sm:$0xf]
    %v226 = vld [vmem:[#allocation2 + $0x2d4] sm:$0xf]
    %v227 = vld [vmem:[#allocation2 + $0x2d8] sm:$0xf]
    %v228 = vld [vmem:[#allocation2 + $0x2dc] sm:$0xf]
    %v229 = vld [vmem:[#allocation2 + $0x2e0] sm:$0xf]
    %v230 = vld [vmem:[#allocation2 + $0x2e4] sm:$0xf]
    %v231 = vld [vmem:[#allocation2 + $0x2e8] sm:$0xf]
    %v232 = vld [vmem:[#allocation2 + $0x2ec] sm:$0xf]
    %v233 = vld [vmem:[#allocation2 + $0x2f0] sm:$0xf]
    %v234 = vld [vmem:[#allocation2 + $0x2f4] sm:$0xf]
    %v235 = vld [vmem:[#allocation2 + $0x2f8] sm:$0xf]
    %v236 = vld [vmem:[#allocation2 + $0x2fc] sm:$0xf]
    %v237 = vld [vmem:[#allocation2 + $0x300] sm:$0xf]
    %v238 = vld [vmem:[#allocation2 + $0x304] sm:$0xf]
    %v239 = vld [vmem:[#allocation2 + $0x308] sm:$0xf]
    %v240 = vld [vmem:[#allocation2 + $0x30c] sm:$0xf]
    %v241 = vld [vmem:[#allocation2 + $0x310] sm:$0xf]
    %v242 = vld [vmem:[#allocation2 + $0x314] sm:$0xf]
    %v243 = vld [vmem:[#allocation2 + $0x318] sm:$0xf]
    %v244 = vld [vmem:[#allocation2 + $0x31c] sm:$0xf]
    %v245 = vld [vmem:[#allocation2 + $0x320] sm:$0xf]
    %v246 = vld [vmem:[#allocation2 + $0x324] sm:$0xf]
    %v247 = vld [vmem:[#allocation2 + $0x328] sm:$0xf]
    %v248 = vld [vmem:[#allocation2 + $0x32c] sm:$0xf]
    %v249 = vld [vmem:[#allocation2 + $0x330] sm:$0xf]
    %v250 = vld [vmem:[#allocation2 + $0x334] sm:$0xf]
    %v251 = vld [vmem:[#allocation2 + $0x338] sm:$0xf]
    %v252 = vld [vmem:[#allocation2 + $0x33c] sm:$0xf]
    %v253 = vld [vmem:[#allocation2 + $0x340] sm:$0xf]
    %v254 = vld [vmem:[#allocation2 + $0x344] sm:$0xf]
    %v255 = vld [vmem:[#allocation2 + $0x348] sm:$0xf]
    %v256 = vld [vmem:[#allocation2 + $0x34c] sm:$0xf]
    %v257 = vld [vmem:[#allocation2 + $0x350] sm:$0xf]
    %v258 = vld [vmem:[#allocation2 + $0x354] sm:$0xf]
    %v259 = vld [vmem:[#allocation2 + $0x358] sm:$0xf]
    %v260 = vld [vmem:[#allocation2 + $0x35c] sm:$0xf]
    %v261 = vld [vmem:[#allocation2 + $0x360] sm:$0xf]
    %v262 = vld [vmem:[#allocation2 + $0x364] sm:$0xf]
    %v263 = vld [vmem:[#allocation2 + $0x368] sm:$0xf]
    %v264 = vld [vmem:[#allocation2 + $0x36c] sm:$0xf]
    %v265 = vld [vmem:[#allocation2 + $0x370] sm:$0xf]
    %v266 = vld [vmem:[#allocation2 + $0x374] sm:$0xf]
    %v267 = vld [vmem:[#allocation2 + $0x378] sm:$0xf]
    %v268 = vld [vmem:[#allocation2 + $0x37c] sm:$0xf]
    %v269 = vld [vmem:[#allocation2 + $0x380] sm:$0xf]
    %v270 = vld [vmem:[#allocation2 + $0x384] sm:$0xf]
    %v271 = vld [vmem:[#allocation2 + $0x388] sm:$0xf]
    %v272 = vld [vmem:[#allocation2 + $0x38c] sm:$0xf]
    %v273 = vld [vmem:[#allocation2 + $0x390] sm:$0xf]
    %v274 = vld [vmem:[#allocation2 + $0x394] sm:$0xf]
    %v275 = vld [vmem:[#allocation2 + $0x398] sm:$0xf]
    %v276 = vld [vmem:[#allocation2 + $0x39c] sm:$0xf]
    %v277 = vld [vmem:[#allocation2 + $0x3a0] sm:$0xf]
    %v278 = vld [vmem:[#allocation2 + $0x3a4] sm:$0xf]
    %v279 = vld [vmem:[#allocation2 + $0x3a8] sm:$0xf]
    %v280 = vld [vmem:[#allocation2 + $0x3ac] sm:$0xf]
    %v281 = vld [vmem:[#allocation2 + $0x3b0] sm:$0xf]
    %v282 = vld [vmem:[#allocation2 + $0x3b4] sm:$0xf]
    %v283 = vld [vmem:[#allocation2 + $0x3b8] sm:$0xf]
    %v284 = vld [vmem:[#allocation2 + $0x3bc] sm:$0xf]
    %v285 = vld [vmem:[#allocation2 + $0x3c0] sm:$0xf]
    %v286 = vld [vmem:[#allocation2 + $0x3c4] sm:$0xf]
    %v287 = vld [vmem:[#allocation2 + $0x3c8] sm:$0xf]
    %v288 = vld [vmem:[#allocation2 + $0x3cc] sm:$0xf]
    %v289 = vld [vmem:[#allocation2 + $0x3d0] sm:$0xf]
    %v290 = vld [vmem:[#allocation2 + $0x3d4] sm:$0xf]
    %v291 = vld [vmem:[#allocation2 + $0x3d8] sm:$0xf]
    %v292 = vld [vmem:[#allocation2 + $0x3dc] sm:$0xf]
    %v293 = vld [vmem:[#allocation2 + $0x3e0] sm:$0xf]
    %v294 = vld [vmem:[#allocation2 + $0x3e4] sm:$0xf]
    %v295 = vld [vmem:[#allocation2 + $0x3e8] sm:$0xf]
    %v296 = vld [vmem:[#allocation2 + $0x3ec] sm:$0xf]
    %v297 = vld [vmem:[#allocation2 + $0x3f0] sm:$0xf]
    %v298 = vld [vmem:[#allocation2 + $0x3f4] sm:$0xf]
    %v299 = vld [vmem:[#allocation2 + $0x3f8] sm:$0xf]
    %v300 = vld [vmem:[#allocation2 + $0x3fc] sm:$0xf]
    %v301 = vmax.f32 %v45, %v109
    %v302 = vmax.f32 %v46, %v110
    %v303 = vmax.f32 %v47, %v111
    %v304 = vmax.f32 %v48, %v112
    %v305 = vmax.f32 %v49, %v113
    %v306 = vmax.f32 %v50, %v114
    %v307 = vmax.f32 %v51, %v115
    %v308 = vmax.f32 %v52, %v116
    %v309 = vmax.f32 %v53, %v117
    %v310 = vmax.f32 %v54, %v118
    %v311 = vmax.f32 %v55, %v119
    %v312 = vmax.f32 %v56, %v120
    %v313 = vmax.f32 %v57, %v121
    %v314 = vmax.f32 %v58, %v122
    %v315 = vmax.f32 %v59, %v123
    %v316 = vmax.f32 %v60, %v124
    %v317 = vmax.f32 %v61, %v125
    %v318 = vmax.f32 %v62, %v126
    %v319 = vmax.f32 %v63, %v127
    %v320 = vmax.f32 %v64, %v128
    %v321 = vmax.f32 %v65, %v129
    %v322 = vmax.f32 %v66, %v130
    %v323 = vmax.f32 %v67, %v131
    %v324 = vmax.f32 %v68, %v132
    %v325 = vmax.f32 %v69, %v133
    %v326 = vmax.f32 %v70, %v134
    %v327 = vmax.f32 %v71, %v135
    %v328 = vmax.f32 %v72, %v136
    %v329 = vmax.f32 %v73, %v137
    %v330 = vmax.f32 %v74, %v138
    %v331 = vmax.f32 %v75, %v139
    %v332 = vmax.f32 %v76, %v140
    %v333 = vmax.f32 %v77, %v141
    %v334 = vmax.f32 %v78, %v142
    %v335 = vmax.f32 %v79, %v143
    %v336 = vmax.f32 %v80, %v144
    %v337 = vmax.f32 %v81, %v145
    %v338 = vmax.f32 %v82, %v146
    %v339 = vmax.f32 %v83, %v147
    %v340 = vmax.f32 %v84, %v148
    %v341 = vmax.f32 %v85, %v149
    %v342 = vmax.f32 %v86, %v150
    %v343 = vmax.f32 %v87, %v151
    %v344 = vmax.f32 %v88, %v152
    %v345 = vmax.f32 %v89, %v153
    %v346 = vmax.f32 %v90, %v154
    %v347 = vmax.f32 %v91, %v155
    %v348 = vmax.f32 %v92, %v156
    %v349 = vmax.f32 %v93, %v157
    %v350 = vmax.f32 %v94, %v158
    %v351 = vmax.f32 %v95, %v159
    %v352 = vmax.f32 %v96, %v160
    %v353 = vmax.f32 %v97, %v161
    %v354 = vmax.f32 %v98, %v162
    %v355 = vmax.f32 %v99, %v163
    %v356 = vmax.f32 %v100, %v164
    %v357 = vmax.f32 %v101, %v165
    %v358 = vmax.f32 %v102, %v166
    %v359 = vmax.f32 %v103, %v167
    %v360 = vmax.f32 %v104, %v168
    %v361 = vmax.f32 %v105, %v169
    %v362 = vmax.f32 %v106, %v170
    %v363 = vmax.f32 %v107, %v171
    %v364 = vmax.f32 %v108, %v172
    %v365 = vmax.f32 %v173, %v237
    %v366 = vmax.f32 %v174, %v238
    %v367 = vmax.f32 %v175, %v239
    %v368 = vmax.f32 %v176, %v240
    %v369 = vmax.f32 %v177, %v241
    %v370 = vmax.f32 %v178, %v242
    %v371 = vmax.f32 %v179, %v243
    %v372 = vmax.f32 %v180, %v244
    %v373 = vmax.f32 %v181, %v245
    %v374 = vmax.f32 %v182, %v246
    %v375 = vmax.f32 %v183, %v247
    %v376 = vmax.f32 %v184, %v248
    %v377 = vmax.f32 %v185, %v249
    %v378 = vmax.f32 %v186, %v250
    %v379 = vmax.f32 %v187, %v251
    %v380 = vmax.f32 %v188, %v252
    %v381 = vmax.f32 %v189, %v253
    %v382 = vmax.f32 %v190, %v254
    %v383 = vmax.f32 %v191, %v255
    %v384 = vmax.f32 %v192, %v256
    %v385 = vmax.f32 %v193, %v257
    %v386 = vmax.f32 %v194, %v258
    %v387 = vmax.f32 %v195, %v259
    %v388 = vmax.f32 %v196, %v260
    %v389 = vmax.f32 %v197, %v261
    %v390 = vmax.f32 %v198, %v262
    %v391 = vmax.f32 %v199, %v263
    %v392 = vmax.f32 %v200, %v264
    %v393 = vmax.f32 %v201, %v265
    %v394 = vmax.f32 %v202, %v266
    %v395 = vmax.f32 %v203, %v267
    %v396 = vmax.f32 %v204, %v268
    %v397 = vmax.f32 %v205, %v269
    %v398 = vmax.f32 %v206, %v270
    %v399 = vmax.f32 %v207, %v271
    %v400 = vmax.f32 %v208, %v272
    %v401 = vmax.f32 %v209, %v273
    %v402 = vmax.f32 %v210, %v274
    %v403 = vmax.f32 %v211, %v275
    %v404 = vmax.f32 %v212, %v276
    %v405 = vmax.f32 %v213, %v277
    %v406 = vmax.f32 %v214, %v278
    %v407 = vmax.f32 %v215, %v279
    %v408 = vmax.f32 %v216, %v280
    %v409 = vmax.f32 %v217, %v281
    %v410 = vmax.f32 %v218, %v282
    %v411 = vmax.f32 %v219, %v283
    %v412 = vmax.f32 %v220, %v284
    %v413 = vmax.f32 %v221, %v285
    %v414 = vmax.f32 %v222, %v286
    %v415 = vmax.f32 %v223, %v287
    %v416 = vmax.f32 %v224, %v288
    %v417 = vmax.f32 %v225, %v289
    %v418 = vmax.f32 %v226, %v290
    %v419 = vmax.f32 %v227, %v291
    %v420 = vmax.f32 %v228, %v292
    %v421 = vmax.f32 %v229, %v293
    %v422 = vmax.f32 %v230, %v294
    %v423 = vmax.f32 %v231, %v295
    %v424 = vmax.f32 %v232, %v296
    %v425 = vmax.f32 %v233, %v297
    %v426 = vmax.f32 %v234, %v298
    %v427 = vmax.f32 %v235, %v299
    %v428 = vmax.f32 %v236, %v300
    %v429 = vmax.f32 %v365, %v109
    %v430 = vmax.f32 %v366, %v110
    %v431 = vmax.f32 %v367, %v111
    %v432 = vmax.f32 %v368, %v112
    %v433 = vmax.f32 %v369, %v113
    %v434 = vmax.f32 %v370, %v114
    %v435 = vmax.f32 %v371, %v115
    %v436 = vmax.f32 %v372, %v116
    %v437 = vmax.f32 %v373, %v117
    %v438 = vmax.f32 %v374, %v118
    %v439 = vmax.f32 %v375, %v119
    %v440 = vmax.f32 %v376, %v120
    %v441 = vmax.f32 %v377, %v121
    %v442 = vmax.f32 %v378, %v122
    %v443 = vmax.f32 %v379, %v123
    %v444 = vmax.f32 %v380, %v124
    %v445 = vmax.f32 %v381, %v125
    %v446 = vmax.f32 %v382, %v126
    %v447 = vmax.f32 %v383, %v127
    %v448 = vmax.f32 %v384, %v128
    %v449 = vmax.f32 %v385, %v129
    %v450 = vmax.f32 %v386, %v130
    %v451 = vmax.f32 %v387, %v131
    %v452 = vmax.f32 %v388, %v132
    %v453 = vmax.f32 %v389, %v133
    %v454 = vmax.f32 %v390, %v134
    %v455 = vmax.f32 %v391, %v135
    %v456 = vmax.f32 %v392, %v136
    %v457 = vmax.f32 %v393, %v137
    %v458 = vmax.f32 %v394, %v138
    %v459 = vmax.f32 %v395, %v139
    %v460 = vmax.f32 %v396, %v140
    %v461 = vmax.f32 %v397, %v141
    %v462 = vmax.f32 %v398, %v142
    %v463 = vmax.f32 %v399, %v143
    %v464 = vmax.f32 %v400, %v144
    %v465 = vmax.f32 %v401, %v145
    %v466 = vmax.f32 %v402, %v146
    %v467 = vmax.f32 %v403, %v147
    %v468 = vmax.f32 %v404, %v148
    %v469 = vmax.f32 %v405, %v149
    %v470 = vmax.f32 %v406, %v150
    %v471 = vmax.f32 %v407, %v151
    %v472 = vmax.f32 %v408, %v152
    %v473 = vmax.f32 %v409, %v153
    %v474 = vmax.f32 %v410, %v154
    %v475 = vmax.f32 %v411, %v155
    %v476 = vmax.f32 %v412, %v156
    %v477 = vmax.f32 %v413, %v157
    %v478 = vmax.f32 %v414, %v158
    %v479 = vmax.f32 %v415, %v159
    %v480 = vmax.f32 %v416, %v160
    %v481 = vmax.f32 %v417, %v161
    %v482 = vmax.f32 %v418, %v162
    %v483 = vmax.f32 %v419, %v163
    %v484 = vmax.f32 %v420, %v164
    %v485 = vmax.f32 %v421, %v165
    %v486 = vmax.f32 %v422, %v166
    %v487 = vmax.f32 %v423, %v167
    %v488 = vmax.f32 %v424, %v168
    %v489 = vmax.f32 %v425, %v169
    %v490 = vmax.f32 %v426, %v170
    %v491 = vmax.f32 %v427, %v171
    %v492 = vmax.f32 %v428, %v172
    %v493 = vmax.f32 %v301, %v309
    %v494 = vmax.f32 %v302, %v310
    %v495 = vmax.f32 %v303, %v311
    %v496 = vmax.f32 %v304, %v312
    %v497 = vmax.f32 %v305, %v313
    %v498 = vmax.f32 %v306, %v314
    %v499 = vmax.f32 %v307, %v315
    %v500 = vmax.f32 %v308, %v316
    %v501 = vmax.f32 %v317, %v325
    %v502 = vmax.f32 %v318, %v326
    %v503 = vmax.f32 %v319, %v327
    %v504 = vmax.f32 %v320, %v328
    %v505 = vmax.f32 %v321, %v329
    %v506 = vmax.f32 %v322, %v330
    %v507 = vmax.f32 %v323, %v331
    %v508 = vmax.f32 %v324, %v332
    %v509 = vmax.f32 %v333, %v341
    %v510 = vmax.f32 %v334, %v342
    %v511 = vmax.f32 %v335, %v343
    %v512 = vmax.f32 %v336, %v344
    %v513 = vmax.f32 %v337, %v345
    %v514 = vmax.f32 %v338, %v346
    %v515 = vmax.f32 %v339, %v347
    %v516 = vmax.f32 %v340, %v348
    %v517 = vmax.f32 %v349, %v357
    %v518 = vmax.f32 %v350, %v358
    %v519 = vmax.f32 %v351, %v359
    %v520 = vmax.f32 %v352, %v360
    %v521 = vmax.f32 %v353, %v361
    %v522 = vmax.f32 %v354, %v362
    %v523 = vmax.f32 %v355, %v363
    %v524 = vmax.f32 %v356, %v364
    %v525 = vmax.f32 %v429, %v437
    %v526 = vmax.f32 %v430, %v438
    %v527 = vmax.f32 %v431, %v439
    %v528 = vmax.f32 %v432, %v440
    %v529 = vmax.f32 %v433, %v441
    %v530 = vmax.f32 %v434, %v442
    %v531 = vmax.f32 %v435, %v443
    %v532 = vmax.f32 %v436, %v444
    %v533 = vmax.f32 %v445, %v453
    %v534 = vmax.f32 %v446, %v454
    %v535 = vmax.f32 %v447, %v455
    %v536 = vmax.f32 %v448, %v456
    %v537 = vmax.f32 %v449, %v457
    %v538 = vmax.f32 %v450, %v458
    %v539 = vmax.f32 %v451, %v459
    %v540 = vmax.f32 %v452, %v460
    %v541 = vmax.f32 %v461, %v469
    %v542 = vmax.f32 %v462, %v470
    %v543 = vmax.f32 %v463, %v471
    %v544 = vmax.f32 %v464, %v472
    %v545 = vmax.f32 %v465, %v473
    %v546 = vmax.f32 %v466, %v474
    %v547 = vmax.f32 %v467, %v475
    %v548 = vmax.f32 %v468, %v476
    %v549 = vmax.f32 %v477, %v485
    %v550 = vmax.f32 %v478, %v486
    %v551 = vmax.f32 %v479, %v487
    %v552 = vmax.f32 %v480, %v488
    %v553 = vmax.f32 %v481, %v489
    %v554 = vmax.f32 %v482, %v490
    %v555 = vmax.f32 %v483, %v491
    %v556 = vmax.f32 %v484, %v492
    %v557 = vmax.f32 %v501, %v309
    %v558 = vmax.f32 %v502, %v310
    %v559 = vmax.f32 %v503, %v311
    %v560 = vmax.f32 %v504, %v312
    %v561 = vmax.f32 %v505, %v313
    %v562 = vmax.f32 %v506, %v314
    %v563 = vmax.f32 %v507, %v315
    %v564 = vmax.f32 %v508, %v316
    %v565 = vmax.f32 %v509, %v325
    %v566 = vmax.f32 %v510, %v326
    %v567 = vmax.f32 %v511, %v327
    %v568 = vmax.f32 %v512, %v328
    %v569 = vmax.f32 %v513, %v329
    %v570 = vmax.f32 %v514, %v330
    %v571 = vmax.f32 %v515, %v331
    %v572 = vmax.f32 %v516, %v332
    %v573 = vmax.f32 %v517, %v341
    %v574 = vmax.f32 %v518, %v342
    %v575 = vmax.f32 %v519, %v343
    %v576 = vmax.f32 %v520, %v344
    %v577 = vmax.f32 %v521, %v345
    %v578 = vmax.f32 %v522, %v346
    %v579 = vmax.f32 %v523, %v347
    %v580 = vmax.f32 %v524, %v348
    %v581 = vmax.f32 %v533, %v437
    %v582 = vmax.f32 %v534, %v438
    %v583 = vmax.f32 %v535, %v439
    %v584 = vmax.f32 %v536, %v440
    %v585 = vmax.f32 %v537, %v441
    %v586 = vmax.f32 %v538, %v442
    %v587 = vmax.f32 %v539, %v443
    %v588 = vmax.f32 %v540, %v444
    %v589 = vmax.f32 %v541, %v453
    %v590 = vmax.f32 %v542, %v454
    %v591 = vmax.f32 %v543, %v455
    %v592 = vmax.f32 %v544, %v456
    %v593 = vmax.f32 %v545, %v457
    %v594 = vmax.f32 %v546, %v458
    %v595 = vmax.f32 %v547, %v459
    %v596 = vmax.f32 %v548, %v460
    %v597 = vmax.f32 %v549, %v469
    %v598 = vmax.f32 %v550, %v470
    %v599 = vmax.f32 %v551, %v471
    %v600 = vmax.f32 %v552, %v472
    %v601 = vmax.f32 %v553, %v473
    %v602 = vmax.f32 %v554, %v474
    %v603 = vmax.f32 %v555, %v475
    %v604 = vmax.f32 %v556, %v476
    %v605 = vmax.f32 %v493, %v494
    %v606 = vmax.f32 %v495, %v496
    %v607 = vmax.f32 %v497, %v498
    %v608 = vmax.f32 %v499, %v500
    %v609 = vmax.f32 %v557, %v558
    %v610 = vmax.f32 %v559, %v560
    %v611 = vmax.f32 %v561, %v562
    %v612 = vmax.f32 %v563, %v564
    %v613 = vmax.f32 %v565, %v566
    %v614 = vmax.f32 %v567, %v568
    %v615 = vmax.f32 %v569, %v570
    %v616 = vmax.f32 %v571, %v572
    %v617 = vmax.f32 %v573, %v574
    %v618 = vmax.f32 %v575, %v576
    %v619 = vmax.f32 %v577, %v578
    %v620 = vmax.f32 %v579, %v580
    %v621 = vmax.f32 %v525, %v526
    %v622 = vmax.f32 %v527, %v528
    %v623 = vmax.f32 %v529, %v530
    %v624 = vmax.f32 %v531, %v532
    %v625 = vmax.f32 %v581, %v582
    %v626 = vmax.f32 %v583, %v584
    %v627 = vmax.f32 %v585, %v586
    %v628 = vmax.f32 %v587, %v588
    %v629 = vmax.f32 %v589, %v590
    %v630 = vmax.f32 %v591, %v592
    %v631 = vmax.f32 %v593, %v594
    %v632 = vmax.f32 %v595, %v596
    %v633 = vmax.f32 %v597, %v598
    %v634 = vmax.f32 %v599, %v600
    %v635 = vmax.f32 %v601, %v602
    %v636 = vmax.f32 %v603, %v604
    %v637 = vmax.f32 %v606, %v494
    %v638 = vmax.f32 %v607, %v496
    %v639 = vmax.f32 %v608, %v498
    %v640 = vmax.f32 %v610, %v558
    %v641 = vmax.f32 %v611, %v560
    %v642 = vmax.f32 %v612, %v562
    %v643 = vmax.f32 %v614, %v566
    %v644 = vmax.f32 %v615, %v568
    %v645 = vmax.f32 %v616, %v570
    %v646 = vmax.f32 %v618, %v574
    %v647 = vmax.f32 %v619, %v576
    %v648 = vmax.f32 %v620, %v578
    %v649 = vmax.f32 %v622, %v526
    %v650 = vmax.f32 %v623, %v528
    %v651 = vmax.f32 %v624, %v530
    %v652 = vmax.f32 %v626, %v582
    %v653 = vmax.f32 %v627, %v584
    %v654 = vmax.f32 %v628, %v586
    %v655 = vmax.f32 %v630, %v590
    %v656 = vmax.f32 %v631, %v592
    %v657 = vmax.f32 %v632, %v594
    %v658 = vmax.f32 %v634, %v598
    %v659 = vmax.f32 %v635, %v600
    %v660 = vmax.f32 %v636, %v602
    %vm661 = vcmask 1043456
    %v662 = vsel %vm661, %v605, 0.0
    %663 = vadd.xlane.f32.xlu0 %v662
    %v664 = vpop.xlane.xlu0 %663
    %v665 = vsel %vm661, %v637, 0.0
    %666 = vadd.xlane.f32.xlu0 %v665
    %v667 = vpop.xlane.xlu0 %666
    %v668 = vsel %vm661, %v638, 0.0
    %669 = vadd.xlane.f32.xlu0 %v668
    %v670 = vpop.xlane.xlu0 %669
    %v671 = vsel %vm661, %v639, 0.0
    %672 = vadd.xlane.f32.xlu0 %v671
    %v673 = vpop.xlane.xlu0 %672
    %v674 = vsel %vm661, %v609, 0.0
    %675 = vadd.xlane.f32.xlu0 %v674
    %v676 = vpop.xlane.xlu0 %675
    %v677 = vsel %vm661, %v640, 0.0
    %678 = vadd.xlane.f32.xlu0 %v677
    %v679 = vpop.xlane.xlu0 %678
    %v680 = vsel %vm661, %v641, 0.0
    %681 = vadd.xlane.f32.xlu0 %v680
    %v682 = vpop.xlane.xlu0 %681
    %v683 = vsel %vm661, %v642, 0.0
    %684 = vadd.xlane.f32.xlu0 %v683
    %v685 = vpop.xlane.xlu0 %684
    %v686 = vsel %vm661, %v613, 0.0
    %687 = vadd.xlane.f32.xlu0 %v686
    %v688 = vpop.xlane.xlu0 %687
    %v689 = vsel %vm661, %v643, 0.0
    %690 = vadd.xlane.f32.xlu0 %v689
    %v691 = vpop.xlane.xlu0 %690
    %v692 = vsel %vm661, %v644, 0.0
    %693 = vadd.xlane.f32.xlu0 %v692
    %v694 = vpop.xlane.xlu0 %693
    %v695 = vsel %vm661, %v645, 0.0
    %696 = vadd.xlane.f32.xlu0 %v695
    %v697 = vpop.xlane.xlu0 %696
    %v698 = vsel %vm661, %v617, 0.0
    %699 = vadd.xlane.f32.xlu0 %v698
    %v700 = vpop.xlane.xlu0 %699
    %v701 = vsel %vm661, %v646, 0.0
    %702 = vadd.xlane.f32.xlu0 %v701
    %v703 = vpop.xlane.xlu0 %702
    %v704 = vsel %vm661, %v647, 0.0
    %705 = vadd.xlane.f32.xlu0 %v704
    %v706 = vpop.xlane.xlu0 %705
    %v707 = vsel %vm661, %v648, 0.0
    %708 = vadd.xlane.f32.xlu0 %v707
    %v709 = vpop.xlane.xlu0 %708
    %v710 = vsel %vm661, %v621, 0.0
    %711 = vadd.xlane.f32.xlu0 %v710
    %v712 = vpop.xlane.xlu0 %711
    %v713 = vsel %vm661, %v649, 0.0
    %714 = vadd.xlane.f32.xlu0 %v713
    %v715 = vpop.xlane.xlu0 %714
    %v716 = vsel %vm661, %v650, 0.0
    %717 = vadd.xlane.f32.xlu0 %v716
    %v718 = vpop.xlane.xlu0 %717
    %v719 = vsel %vm661, %v651, 0.0
    %720 = vadd.xlane.f32.xlu0 %v719
    %v721 = vpop.xlane.xlu0 %720
    %v722 = vsel %vm661, %v625, 0.0
    %723 = vadd.xlane.f32.xlu0 %v722
    %v724 = vpop.xlane.xlu0 %723
    %v725 = vsel %vm661, %v652, 0.0
    %726 = vadd.xlane.f32.xlu0 %v725
    %v727 = vpop.xlane.xlu0 %726
    %v728 = vsel %vm661, %v653, 0.0
    %729 = vadd.xlane.f32.xlu0 %v728
    %v730 = vpop.xlane.xlu0 %729
    %v731 = vsel %vm661, %v654, 0.0
    %732 = vadd.xlane.f32.xlu0 %v731
    %v733 = vpop.xlane.xlu0 %732
    %v734 = vsel %vm661, %v629, 0.0
    %735 = vadd.xlane.f32.xlu0 %v734
    %v736 = vpop.xlane.xlu0 %735
    %v737 = vsel %vm661, %v655, 0.0
    %738 = vadd.xlane.f32.xlu0 %v737
    %v739 = vpop.xlane.xlu0 %738
    %v740 = vsel %vm661, %v656, 0.0
    %741 = vadd.xlane.f32.xlu0 %v740
    %v742 = vpop.xlane.xlu0 %741
    %v743 = vsel %vm661, %v657, 0.0
    %744 = vadd.xlane.f32.xlu0 %v743
    %v745 = vpop.xlane.xlu0 %744
    %v746 = vsel %vm661, %v633, 0.0
    %747 = vadd.xlane.f32.xlu0 %v746
    %v748 = vpop.xlane.xlu0 %747
    %v749 = vsel %vm661, %v658, 0.0
    %750 = vadd.xlane.f32.xlu0 %v749
    %v751 = vpop.xlane.xlu0 %750
    %v752 = vsel %vm661, %v659, 0.0
    %753 = vadd.xlane.f32.xlu0 %v752
    %v754 = vpop.xlane.xlu0 %753
    %v755 = vsel %vm661, %v660, 0.0
    %756 = vadd.xlane.f32.xlu0 %v755
    %v757 = vpop.xlane.xlu0 %756
    %v758 = vrcp.pop 128.0
    %v759 = vmul.f32 128.0, %v758
    %v760 = vsub.f32 1.0, %v759
    %v761 = vmul.f32 %v758, %v760
    %v762 = vadd.f32 %v758, %v761
    %vm763 = vweird.f32 %v758
    %v764 = vsel %vm763, %v758, %v762
    %v765 = vmul.f32 %v664, %v764
    %v766 = vmul.f32 %v667, %v764
    %v767 = vmul.f32 %v670, %v764
    %v768 = vmul.f32 %v673, %v764
    %v769 = vmul.f32 %v676, %v764
    %v770 = vmul.f32 %v679, %v764
    %v771 = vmul.f32 %v682, %v764
    %v772 = vmul.f32 %v685, %v764
    %v773 = vmul.f32 %v688, %v764
    %v774 = vmul.f32 %v691, %v764
    %v775 = vmul.f32 %v694, %v764
    %v776 = vmul.f32 %v697, %v764
    %v777 = vmul.f32 %v700, %v764
    %v778 = vmul.f32 %v703, %v764
    %v779 = vmul.f32 %v706, %v764
    %v780 = vmul.f32 %v709, %v764
    %v781 = vmul.f32 %v712, %v764
    %v782 = vmul.f32 %v715, %v764
    %v783 = vmul.f32 %v718, %v764
    %v784 = vmul.f32 %v721, %v764
    %v785 = vmul.f32 %v724, %v764
    %v786 = vmul.f32 %v727, %v764
    %v787 = vmul.f32 %v730, %v764
    %v788 = vmul.f32 %v733, %v764
    %v789 = vmul.f32 %v736, %v764
    %v790 = vmul.f32 %v739, %v764
    %v791 = vmul.f32 %v742, %v764
    %v792 = vmul.f32 %v745, %v764
    %v793 = vmul.f32 %v748, %v764
    %v794 = vmul.f32 %v751, %v764
    %v795 = vmul.f32 %v754, %v764
    %v796 = vmul.f32 %v757, %v764
    %v797 = vsub.f32 %v605, %v765
    %v798 = vsub.f32 %v637, %v766
    %v799 = vsub.f32 %v638, %v767
    %v800 = vsub.f32 %v639, %v768
    %v801 = vsub.f32 %v609, %v769
    %v802 = vsub.f32 %v640, %v770
    %v803 = vsub.f32 %v641, %v771
    %v804 = vsub.f32 %v642, %v772
    %v805 = vsub.f32 %v613, %v773
    %v806 = vsub.f32 %v643, %v774
    %v807 = vsub.f32 %v644, %v775
    %v808 = vsub.f32 %v645, %v776
    %v809 = vsub.f32 %v617, %v777
    %v810 = vsub.f32 %v646, %v778
    %v811 = vsub.f32 %v647, %v779
    %v812 = vsub.f32 %v648, %v780
    %v813 = vsub.f32 %v621, %v781
    %v814 = vsub.f32 %v649, %v782
    %v815 = vsub.f32 %v650, %v783
    %v816 = vsub.f32 %v651, %v784
    %v817 = vsub.f32 %v625, %v785
    %v818 = vsub.f32 %v652, %v786
    %v819 = vsub.f32 %v653, %v787
    %v820 = vsub.f32 %v654, %v788
    %v821 = vsub.f32 %v629, %v789
    %v822 = vsub.f32 %v655, %v790
    %v823 = vsub.f32 %v656, %v791
    %v824 = vsub.f32 %v657, %v792
    %v825 = vsub.f32 %v633, %v793
    %v826 = vsub.f32 %v658, %v794
    %v827 = vsub.f32 %v659, %v795
    %v828 = vsub.f32 %v660, %v796
    %v829 = vmul.f32 %v797, %v797
    %v830 = vmul.f32 %v798, %v798
    %v831 = vmul.f32 %v799, %v799
    %v832 = vmul.f32 %v800, %v800
    %v833 = vmul.f32 %v801, %v801
    %v834 = vmul.f32 %v802, %v802
    %v835 = vmul.f32 %v803, %v803
    %v836 = vmul.f32 %v804, %v804
    %v837 = vmul.f32 %v805, %v805
    %v838 = vmul.f32 %v806, %v806
    %v839 = vmul.f32 %v807, %v807
    %v840 = vmul.f32 %v808, %v808
    %v841 = vmul.f32 %v809, %v809
    %v842 = vmul.f32 %v810, %v810
    %v843 = vmul.f32 %v811, %v811
    %v844 = vmul.f32 %v812, %v812
    %v845 = vmul.f32 %v813, %v813
    %v846 = vmul.f32 %v814, %v814
    %v847 = vmul.f32 %v815, %v815
    %v848 = vmul.f32 %v816, %v816
    %v849 = vmul.f32 %v817, %v817
    %v850 = vmul.f32 %v818, %v818
    %v851 = vmul.f32 %v819, %v819
    %v852 = vmul.f32 %v820, %v820
    %v853 = vmul.f32 %v821, %v821
    %v854 = vmul.f32 %v822, %v822
    %v855 = vmul.f32 %v823, %v823
    %v856 = vmul.f32 %v824, %v824
    %v857 = vmul.f32 %v825, %v825
    %v858 = vmul.f32 %v826, %v826
    %v859 = vmul.f32 %v827, %v827
    %v860 = vmul.f32 %v828, %v828
    %v861 = vsel %vm661, %v829, 0.0
    %862 = vadd.xlane.f32.xlu0 %v861
    %v863 = vpop.xlane.xlu0 %862
    %v864 = vsel %vm661, %v830, 0.0
    %865 = vadd.xlane.f32.xlu0 %v864
    %v866 = vpop.xlane.xlu0 %865
    %v867 = vsel %vm661, %v831, 0.0
    %868 = vadd.xlane.f32.xlu0 %v867
    %v869 = vpop.xlane.xlu0 %868
    %v870 = vsel %vm661, %v832, 0.0
    %871 = vadd.xlane.f32.xlu0 %v870
    %v872 = vpop.xlane.xlu0 %871
    %v873 = vsel %vm661, %v833, 0.0
    %874 = vadd.xlane.f32.xlu0 %v873
    %v875 = vpop.xlane.xlu0 %874
    %v876 = vsel %vm661, %v834, 0.0
    %877 = vadd.xlane.f32.xlu0 %v876
    %v878 = vpop.xlane.xlu0 %877
    %v879 = vsel %vm661, %v835, 0.0
    %880 = vadd.xlane.f32.xlu0 %v879
    %v881 = vpop.xlane.xlu0 %880
    %v882 = vsel %vm661, %v836, 0.0
    %883 = vadd.xlane.f32.xlu0 %v882
    %v884 = vpop.xlane.xlu0 %883
    %v885 = vsel %vm661, %v837, 0.0
    %886 = vadd.xlane.f32.xlu0 %v885
    %v887 = vpop.xlane.xlu0 %886
    %v888 = vsel %vm661, %v838, 0.0
    %889 = vadd.xlane.f32.xlu0 %v888
    %v890 = vpop.xlane.xlu0 %889
    %v891 = vsel %vm661, %v839, 0.0
    %892 = vadd.xlane.f32.xlu0 %v891
    %v893 = vpop.xlane.xlu0 %892
    %v894 = vsel %vm661, %v840, 0.0
    %895 = vadd.xlane.f32.xlu0 %v894
    %v896 = vpop.xlane.xlu0 %895
    %v897 = vsel %vm661, %v841, 0.0
    %898 = vadd.xlane.f32.xlu0 %v897
    %v899 = vpop.xlane.xlu0 %898
    %v900 = vsel %vm661, %v842, 0.0
    %901 = vadd.xlane.f32.xlu0 %v900
    %v902 = vpop.xlane.xlu0 %901
    %v903 = vsel %vm661, %v843, 0.0
    %904 = vadd.xlane.f32.xlu0 %v903
    %v905 = vpop.xlane.xlu0 %904
    %v906 = vsel %vm661, %v844, 0.0
    %907 = vadd.xlane.f32.xlu0 %v906
    %v908 = vpop.xlane.xlu0 %907
    %v909 = vsel %vm661, %v845, 0.0
    %910 = vadd.xlane.f32.xlu0 %v909
    %v911 = vpop.xlane.xlu0 %910
    %v912 = vsel %vm661, %v846, 0.0
    %913 = vadd.xlane.f32.xlu0 %v912
    %v914 = vpop.xlane.xlu0 %913
    %v915 = vsel %vm661, %v847, 0.0
    %916 = vadd.xlane.f32.xlu0 %v915
    %v917 = vpop.xlane.xlu0 %916
    %v918 = vsel %vm661, %v848, 0.0
    %919 = vadd.xlane.f32.xlu0 %v918
    %v920 = vpop.xlane.xlu0 %919
    %v921 = vsel %vm661, %v849, 0.0
    %922 = vadd.xlane.f32.xlu0 %v921
    %v923 = vpop.xlane.xlu0 %922
    %v924 = vsel %vm661, %v850, 0.0
    %925 = vadd.xlane.f32.xlu0 %v924
    %v926 = vpop.xlane.xlu0 %925
    %v927 = vsel %vm661, %v851, 0.0
    %928 = vadd.xlane.f32.xlu0 %v927
    %v929 = vpop.xlane.xlu0 %928
    %v930 = vsel %vm661, %v852, 0.0
    %931 = vadd.xlane.f32.xlu0 %v930
    %v932 = vpop.xlane.xlu0 %931
    %v933 = vsel %vm661, %v853, 0.0
    %934 = vadd.xlane.f32.xlu0 %v933
    %v935 = vpop.xlane.xlu0 %934
    %v936 = vsel %vm661, %v854, 0.0
    %937 = vadd.xlane.f32.xlu0 %v936
    %v938 = vpop.xlane.xlu0 %937
    %v939 = vsel %vm661, %v855, 0.0
    %940 = vadd.xlane.f32.xlu0 %v939
    %v941 = vpop.xlane.xlu0 %940
    %v942 = vsel %vm661, %v856, 0.0
    %943 = vadd.xlane.f32.xlu0 %v942
    %v944 = vpop.xlane.xlu0 %943
    %v945 = vsel %vm661, %v857, 0.0
    %946 = vadd.xlane.f32.xlu0 %v945
    %v947 = vpop.xlane.xlu0 %946
    %v948 = vsel %vm661, %v858, 0.0
    %949 = vadd.xlane.f32.xlu0 %v948
    %v950 = vpop.xlane.xlu0 %949
    %v951 = vsel %vm661, %v859, 0.0
    %952 = vadd.xlane.f32.xlu0 %v951
    %v953 = vpop.xlane.xlu0 %952
    %v954 = vsel %vm661, %v860, 0.0
    %955 = vadd.xlane.f32.xlu0 %v954
    %v956 = vpop.xlane.xlu0 %955
    %v957 = vmul.f32 %v863, %v764
    %v958 = vmul.f32 %v866, %v764
    %v959 = vmul.f32 %v869, %v764
    %v960 = vmul.f32 %v872, %v764
    %v961 = vmul.f32 %v875, %v764
    %v962 = vmul.f32 %v878, %v764
    %v963 = vmul.f32 %v881, %v764
    %v964 = vmul.f32 %v884, %v764
    %v965 = vmul.f32 %v887, %v764
    %v966 = vmul.f32 %v890, %v764
    %v967 = vmul.f32 %v893, %v764
    %v968 = vmul.f32 %v896, %v764
    %v969 = vmul.f32 %v899, %v764
    %v970 = vmul.f32 %v902, %v764
    %v971 = vmul.f32 %v905, %v764
    %v972 = vmul.f32 %v908, %v764
    %v973 = vmul.f32 %v911, %v764
    %v974 = vmul.f32 %v914, %v764
    %v975 = vmul.f32 %v917, %v764
    %v976 = vmul.f32 %v920, %v764
    %v977 = vmul.f32 %v923, %v764
    %v978 = vmul.f32 %v926, %v764
    %v979 = vmul.f32 %v929, %v764
    %v980 = vmul.f32 %v932, %v764
    %v981 = vmul.f32 %v935, %v764
    %v982 = vmul.f32 %v938, %v764
    %v983 = vmul.f32 %v941, %v764
    %v984 = vmul.f32 %v944, %v764
    %v985 = vmul.f32 %v947, %v764
    %v986 = vmul.f32 %v950, %v764
    %v987 = vmul.f32 %v953, %v764
    %v988 = vmul.f32 %v956, %v764
    %v989 = vadd.f32 %v957, 1e-06
    %v990 = vadd.f32 %v958, 1e-06
    %v991 = vadd.f32 %v959, 1e-06
    %v992 = vadd.f32 %v960, 1e-06
    %v993 = vadd.f32 %v961, 1e-06
    %v994 = vadd.f32 %v962, 1e-06
    %v995 = vadd.f32 %v963, 1e-06
    %v996 = vadd.f32 %v964, 1e-06
    %v997 = vadd.f32 %v965, 1e-06
    %v998 = vadd.f32 %v966, 1e-06
    %v999 = vadd.f32 %v967, 1e-06
    %v1000 = vadd.f32 %v968, 1e-06
    %v1001 = vadd.f32 %v969, 1e-06
    %v1002 = vadd.f32 %v970, 1e-06
    %v1003 = vadd.f32 %v971, 1e-06
    %v1004 = vadd.f32 %v972, 1e-06
    %v1005 = vadd.f32 %v973, 1e-06
    %v1006 = vadd.f32 %v974, 1e-06
    %v1007 = vadd.f32 %v975, 1e-06
    %v1008 = vadd.f32 %v976, 1e-06
    %v1009 = vadd.f32 %v977, 1e-06
    %v1010 = vadd.f32 %v978, 1e-06
    %v1011 = vadd.f32 %v979, 1e-06
    %v1012 = vadd.f32 %v980, 1e-06
    %v1013 = vadd.f32 %v981, 1e-06
    %v1014 = vadd.f32 %v982, 1e-06
    %v1015 = vadd.f32 %v983, 1e-06
    %v1016 = vadd.f32 %v984, 1e-06
    %v1017 = vadd.f32 %v985, 1e-06
    %v1018 = vadd.f32 %v986, 1e-06
    %v1019 = vadd.f32 %v987, 1e-06
    %v1020 = vadd.f32 %v988, 1e-06
    %v1021 = vrsqrt.pop %v989
    %v1022 = vmul.f32 %v1021, %v989
    %v1023 = vmul.f32 %v1022, %v1021
    %v1024 = vmul.f32 0.5, %v1023
    %v1025 = vsub.f32 1.5, %v1024
    %v1026 = vmul.f32 %v1021, %v1025
    %vm1027 = vweird.f32 %v989
    %vm1028 = vweird.f32 %v1021
    %vm1029 = vmor %vm1027, %vm1028
    %v1030 = vsel %vm1029, %v1021, %v1026
    %v1031 = vrsqrt.pop %v990
    %v1032 = vmul.f32 %v1031, %v990
    %v1033 = vmul.f32 %v1032, %v1031
    %v1034 = vmul.f32 0.5, %v1033
    %v1035 = vsub.f32 1.5, %v1034
    %v1036 = vmul.f32 %v1031, %v1035
    %vm1037 = vweird.f32 %v990
    %vm1038 = vweird.f32 %v1031
    %vm1039 = vmor %vm1037, %vm1038
    %v1040 = vsel %vm1039, %v1031, %v1036
    %v1041 = vrsqrt.pop %v991
    %v1042 = vmul.f32 %v1041, %v991
    %v1043 = vmul.f32 %v1042, %v1041
    %v1044 = vmul.f32 0.5, %v1043
    %v1045 = vsub.f32 1.5, %v1044
    %v1046 = vmul.f32 %v1041, %v1045
    %vm1047 = vweird.f32 %v991
    %vm1048 = vweird.f32 %v1041
    %vm1049 = vmor %vm1047, %vm1048
    %v1050 = vsel %vm1049, %v1041, %v1046
    %v1051 = vrsqrt.pop %v992
    %v1052 = vmul.f32 %v1051, %v992
    %v1053 = vmul.f32 %v1052, %v1051
    %v1054 = vmul.f32 0.5, %v1053
    %v1055 = vsub.f32 1.5, %v1054
    %v1056 = vmul.f32 %v1051, %v1055
    %vm1057 = vweird.f32 %v992
    %vm1058 = vweird.f32 %v1051
    %vm1059 = vmor %vm1057, %vm1058
    %v1060 = vsel %vm1059, %v1051, %v1056
    %v1061 = vrsqrt.pop %v993
    %v1062 = vmul.f32 %v1061, %v993
    %v1063 = vmul.f32 %v1062, %v1061
    %v1064 = vmul.f32 0.5, %v1063
    %v1065 = vsub.f32 1.5, %v1064
    %v1066 = vmul.f32 %v1061, %v1065
    %vm1067 = vweird.f32 %v993
    %vm1068 = vweird.f32 %v1061
    %vm1069 = vmor %vm1067, %vm1068
    %v1070 = vsel %vm1069, %v1061, %v1066
    %v1071 = vrsqrt.pop %v994
    %v1072 = vmul.f32 %v1071, %v994
    %v1073 = vmul.f32 %v1072, %v1071
    %v1074 = vmul.f32 0.5, %v1073
    %v1075 = vsub.f32 1.5, %v1074
    %v1076 = vmul.f32 %v1071, %v1075
    %vm1077 = vweird.f32 %v994
    %vm1078 = vweird.f32 %v1071
    %vm1079 = vmor %vm1077, %vm1078
    %v1080 = vsel %vm1079, %v1071, %v1076
    %v1081 = vrsqrt.pop %v995
    %v1082 = vmul.f32 %v1081, %v995
    %v1083 = vmul.f32 %v1082, %v1081
    %v1084 = vmul.f32 0.5, %v1083
    %v1085 = vsub.f32 1.5, %v1084
    %v1086 = vmul.f32 %v1081, %v1085
    %vm1087 = vweird.f32 %v995
    %vm1088 = vweird.f32 %v1081
    %vm1089 = vmor %vm1087, %vm1088
    %v1090 = vsel %vm1089, %v1081, %v1086
    %v1091 = vrsqrt.pop %v996
    %v1092 = vmul.f32 %v1091, %v996
    %v1093 = vmul.f32 %v1092, %v1091
    %v1094 = vmul.f32 0.5, %v1093
    %v1095 = vsub.f32 1.5, %v1094
    %v1096 = vmul.f32 %v1091, %v1095
    %vm1097 = vweird.f32 %v996
    %vm1098 = vweird.f32 %v1091
    %vm1099 = vmor %vm1097, %vm1098
    %v1100 = vsel %vm1099, %v1091, %v1096
    %v1101 = vrsqrt.pop %v997
    %v1102 = vmul.f32 %v1101, %v997
    %v1103 = vmul.f32 %v1102, %v1101
    %v1104 = vmul.f32 0.5, %v1103
    %v1105 = vsub.f32 1.5, %v1104
    %v1106 = vmul.f32 %v1101, %v1105
    %vm1107 = vweird.f32 %v997
    %vm1108 = vweird.f32 %v1101
    %vm1109 = vmor %vm1107, %vm1108
    %v1110 = vsel %vm1109, %v1101, %v1106
    %v1111 = vrsqrt.pop %v998
    %v1112 = vmul.f32 %v1111, %v998
    %v1113 = vmul.f32 %v1112, %v1111
    %v1114 = vmul.f32 0.5, %v1113
    %v1115 = vsub.f32 1.5, %v1114
    %v1116 = vmul.f32 %v1111, %v1115
    %vm1117 = vweird.f32 %v998
    %vm1118 = vweird.f32 %v1111
    %vm1119 = vmor %vm1117, %vm1118
    %v1120 = vsel %vm1119, %v1111, %v1116
    %v1121 = vrsqrt.pop %v999
    %v1122 = vmul.f32 %v1121, %v999
    %v1123 = vmul.f32 %v1122, %v1121
    %v1124 = vmul.f32 0.5, %v1123
    %v1125 = vsub.f32 1.5, %v1124
    %v1126 = vmul.f32 %v1121, %v1125
    %vm1127 = vweird.f32 %v999
    %vm1128 = vweird.f32 %v1121
    %vm1129 = vmor %vm1127, %vm1128
    %v1130 = vsel %vm1129, %v1121, %v1126
    %v1131 = vrsqrt.pop %v1000
    %v1132 = vmul.f32 %v1131, %v1000
    %v1133 = vmul.f32 %v1132, %v1131
    %v1134 = vmul.f32 0.5, %v1133
    %v1135 = vsub.f32 1.5, %v1134
    %v1136 = vmul.f32 %v1131, %v1135
    %vm1137 = vweird.f32 %v1000
    %vm1138 = vweird.f32 %v1131
    %vm1139 = vmor %vm1137, %vm1138
    %v1140 = vsel %vm1139, %v1131, %v1136
    %v1141 = vrsqrt.pop %v1001
    %v1142 = vmul.f32 %v1141, %v1001
    %v1143 = vmul.f32 %v1142, %v1141
    %v1144 = vmul.f32 0.5, %v1143
    %v1145 = vsub.f32 1.5, %v1144
    %v1146 = vmul.f32 %v1141, %v1145
    %vm1147 = vweird.f32 %v1001
    %vm1148 = vweird.f32 %v1141
    %vm1149 = vmor %vm1147, %vm1148
    %v1150 = vsel %vm1149, %v1141, %v1146
    %v1151 = vrsqrt.pop %v1002
    %v1152 = vmul.f32 %v1151, %v1002
    %v1153 = vmul.f32 %v1152, %v1151
    %v1154 = vmul.f32 0.5, %v1153
    %v1155 = vsub.f32 1.5, %v1154
    %v1156 = vmul.f32 %v1151, %v1155
    %vm1157 = vweird.f32 %v1002
    %vm1158 = vweird.f32 %v1151
    %vm1159 = vmor %vm1157, %vm1158
    %v1160 = vsel %vm1159, %v1151, %v1156
    %v1161 = vrsqrt.pop %v1003
    %v1162 = vmul.f32 %v1161, %v1003
    %v1163 = vmul.f32 %v1162, %v1161
    %v1164 = vmul.f32 0.5, %v1163
    %v1165 = vsub.f32 1.5, %v1164
    %v1166 = vmul.f32 %v1161, %v1165
    %vm1167 = vweird.f32 %v1003
    %vm1168 = vweird.f32 %v1161
    %vm1169 = vmor %vm1167, %vm1168
    %v1170 = vsel %vm1169, %v1161, %v1166
    %v1171 = vrsqrt.pop %v1004
    %v1172 = vmul.f32 %v1171, %v1004
    %v1173 = vmul.f32 %v1172, %v1171
    %v1174 = vmul.f32 0.5, %v1173
    %v1175 = vsub.f32 1.5, %v1174
    %v1176 = vmul.f32 %v1171, %v1175
    %vm1177 = vweird.f32 %v1004
    %vm1178 = vweird.f32 %v1171
    %vm1179 = vmor %vm1177, %vm1178
    %v1180 = vsel %vm1179, %v1171, %v1176
    %v1181 = vrsqrt.pop %v1005
    %v1182 = vmul.f32 %v1181, %v1005
    %v1183 = vmul.f32 %v1182, %v1181
    %v1184 = vmul.f32 0.5, %v1183
    %v1185 = vsub.f32 1.5, %v1184
    %v1186 = vmul.f32 %v1181, %v1185
    %vm1187 = vweird.f32 %v1005
    %vm1188 = vweird.f32 %v1181
    %vm1189 = vmor %vm1187, %vm1188
    %v1190 = vsel %vm1189, %v1181, %v1186
    %v1191 = vrsqrt.pop %v1006
    %v1192 = vmul.f32 %v1191, %v1006
    %v1193 = vmul.f32 %v1192, %v1191
    %v1194 = vmul.f32 0.5, %v1193
    %v1195 = vsub.f32 1.5, %v1194
    %v1196 = vmul.f32 %v1191, %v1195
    %vm1197 = vweird.f32 %v1006
    %vm1198 = vweird.f32 %v1191
    %vm1199 = vmor %vm1197, %vm1198
    %v1200 = vsel %vm1199, %v1191, %v1196
    %v1201 = vrsqrt.pop %v1007
    %v1202 = vmul.f32 %v1201, %v1007
    %v1203 = vmul.f32 %v1202, %v1201
    %v1204 = vmul.f32 0.5, %v1203
    %v1205 = vsub.f32 1.5, %v1204
    %v1206 = vmul.f32 %v1201, %v1205
    %vm1207 = vweird.f32 %v1007
    %vm1208 = vweird.f32 %v1201
    %vm1209 = vmor %vm1207, %vm1208
    %v1210 = vsel %vm1209, %v1201, %v1206
    %v1211 = vrsqrt.pop %v1008
    %v1212 = vmul.f32 %v1211, %v1008
    %v1213 = vmul.f32 %v1212, %v1211
    %v1214 = vmul.f32 0.5, %v1213
    %v1215 = vsub.f32 1.5, %v1214
    %v1216 = vmul.f32 %v1211, %v1215
    %vm1217 = vweird.f32 %v1008
    %vm1218 = vweird.f32 %v1211
    %vm1219 = vmor %vm1217, %vm1218
    %v1220 = vsel %vm1219, %v1211, %v1216
    %v1221 = vrsqrt.pop %v1009
    %v1222 = vmul.f32 %v1221, %v1009
    %v1223 = vmul.f32 %v1222, %v1221
    %v1224 = vmul.f32 0.5, %v1223
    %v1225 = vsub.f32 1.5, %v1224
    %v1226 = vmul.f32 %v1221, %v1225
    %vm1227 = vweird.f32 %v1009
    %vm1228 = vweird.f32 %v1221
    %vm1229 = vmor %vm1227, %vm1228
    %v1230 = vsel %vm1229, %v1221, %v1226
    %v1231 = vrsqrt.pop %v1010
    %v1232 = vmul.f32 %v1231, %v1010
    %v1233 = vmul.f32 %v1232, %v1231
    %v1234 = vmul.f32 0.5, %v1233
    %v1235 = vsub.f32 1.5, %v1234
    %v1236 = vmul.f32 %v1231, %v1235
    %vm1237 = vweird.f32 %v1010
    %vm1238 = vweird.f32 %v1231
    %vm1239 = vmor %vm1237, %vm1238
    %v1240 = vsel %vm1239, %v1231, %v1236
    %v1241 = vrsqrt.pop %v1011
    %v1242 = vmul.f32 %v1241, %v1011
    %v1243 = vmul.f32 %v1242, %v1241
    %v1244 = vmul.f32 0.5, %v1243
    %v1245 = vsub.f32 1.5, %v1244
    %v1246 = vmul.f32 %v1241, %v1245
    %vm1247 = vweird.f32 %v1011
    %vm1248 = vweird.f32 %v1241
    %vm1249 = vmor %vm1247, %vm1248
    %v1250 = vsel %vm1249, %v1241, %v1246
    %v1251 = vrsqrt.pop %v1012
    %v1252 = vmul.f32 %v1251, %v1012
    %v1253 = vmul.f32 %v1252, %v1251
    %v1254 = vmul.f32 0.5, %v1253
    %v1255 = vsub.f32 1.5, %v1254
    %v1256 = vmul.f32 %v1251, %v1255
    %vm1257 = vweird.f32 %v1012
    %vm1258 = vweird.f32 %v1251
    %vm1259 = vmor %vm1257, %vm1258
    %v1260 = vsel %vm1259, %v1251, %v1256
    %v1261 = vrsqrt.pop %v1013
    %v1262 = vmul.f32 %v1261, %v1013
    %v1263 = vmul.f32 %v1262, %v1261
    %v1264 = vmul.f32 0.5, %v1263
    %v1265 = vsub.f32 1.5, %v1264
    %v1266 = vmul.f32 %v1261, %v1265
    %vm1267 = vweird.f32 %v1013
    %vm1268 = vweird.f32 %v1261
    %vm1269 = vmor %vm1267, %vm1268
    %v1270 = vsel %vm1269, %v1261, %v1266
    %v1271 = vrsqrt.pop %v1014
    %v1272 = vmul.f32 %v1271, %v1014
    %v1273 = vmul.f32 %v1272, %v1271
    %v1274 = vmul.f32 0.5, %v1273
    %v1275 = vsub.f32 1.5, %v1274
    %v1276 = vmul.f32 %v1271, %v1275
    %vm1277 = vweird.f32 %v1014
    %vm1278 = vweird.f32 %v1271
    %vm1279 = vmor %vm1277, %vm1278
    %v1280 = vsel %vm1279, %v1271, %v1276
    %v1281 = vrsqrt.pop %v1015
    %v1282 = vmul.f32 %v1281, %v1015
    %v1283 = vmul.f32 %v1282, %v1281
    %v1284 = vmul.f32 0.5, %v1283
    %v1285 = vsub.f32 1.5, %v1284
    %v1286 = vmul.f32 %v1281, %v1285
    %vm1287 = vweird.f32 %v1015
    %vm1288 = vweird.f32 %v1281
    %vm1289 = vmor %vm1287, %vm1288
    %v1290 = vsel %vm1289, %v1281, %v1286
    %v1291 = vrsqrt.pop %v1016
    %v1292 = vmul.f32 %v1291, %v1016
    %v1293 = vmul.f32 %v1292, %v1291
    %v1294 = vmul.f32 0.5, %v1293
    %v1295 = vsub.f32 1.5, %v1294
    %v1296 = vmul.f32 %v1291, %v1295
    %vm1297 = vweird.f32 %v1016
    %vm1298 = vweird.f32 %v1291
    %vm1299 = vmor %vm1297, %vm1298
    %v1300 = vsel %vm1299, %v1291, %v1296
    %v1301 = vrsqrt.pop %v1017
    %v1302 = vmul.f32 %v1301, %v1017
    %v1303 = vmul.f32 %v1302, %v1301
    %v1304 = vmul.f32 0.5, %v1303
    %v1305 = vsub.f32 1.5, %v1304
    %v1306 = vmul.f32 %v1301, %v1305
    %vm1307 = vweird.f32 %v1017
    %vm1308 = vweird.f32 %v1301
    %vm1309 = vmor %vm1307, %vm1308
    %v1310 = vsel %vm1309, %v1301, %v1306
    %v1311 = vrsqrt.pop %v1018
    %v1312 = vmul.f32 %v1311, %v1018
    %v1313 = vmul.f32 %v1312, %v1311
    %v1314 = vmul.f32 0.5, %v1313
    %v1315 = vsub.f32 1.5, %v1314
    %v1316 = vmul.f32 %v1311, %v1315
    %vm1317 = vweird.f32 %v1018
    %vm1318 = vweird.f32 %v1311
    %vm1319 = vmor %vm1317, %vm1318
    %v1320 = vsel %vm1319, %v1311, %v1316
    %v1321 = vrsqrt.pop %v1019
    %v1322 = vmul.f32 %v1321, %v1019
    %v1323 = vmul.f32 %v1322, %v1321
    %v1324 = vmul.f32 0.5, %v1323
    %v1325 = vsub.f32 1.5, %v1324
    %v1326 = vmul.f32 %v1321, %v1325
    %vm1327 = vweird.f32 %v1019
    %vm1328 = vweird.f32 %v1321
    %vm1329 = vmor %vm1327, %vm1328
    %v1330 = vsel %vm1329, %v1321, %v1326
    %v1331 = vrsqrt.pop %v1020
    %v1332 = vmul.f32 %v1331, %v1020
    %v1333 = vmul.f32 %v1332, %v1331
    %v1334 = vmul.f32 0.5, %v1333
    %v1335 = vsub.f32 1.5, %v1334
    %v1336 = vmul.f32 %v1331, %v1335
    %vm1337 = vweird.f32 %v1020
    %vm1338 = vweird.f32 %v1331
    %vm1339 = vmor %vm1337, %vm1338
    %v1340 = vsel %vm1339, %v1331, %v1336
    %v1341 = vmul.f32 %v797, %v1030
    %v1342 = vmul.f32 %v798, %v1040
    %v1343 = vmul.f32 %v799, %v1050
    %v1344 = vmul.f32 %v800, %v1060
    %v1345 = vmul.f32 %v801, %v1070
    %v1346 = vmul.f32 %v802, %v1080
    %v1347 = vmul.f32 %v803, %v1090
    %v1348 = vmul.f32 %v804, %v1100
    %v1349 = vmul.f32 %v805, %v1110
    %v1350 = vmul.f32 %v806, %v1120
    %v1351 = vmul.f32 %v807, %v1130
    %v1352 = vmul.f32 %v808, %v1140
    %v1353 = vmul.f32 %v809, %v1150
    %v1354 = vmul.f32 %v810, %v1160
    %v1355 = vmul.f32 %v811, %v1170
    %v1356 = vmul.f32 %v812, %v1180
    %v1357 = vmul.f32 %v813, %v1190
    %v1358 = vmul.f32 %v814, %v1200
    %v1359 = vmul.f32 %v815, %v1210
    %v1360 = vmul.f32 %v816, %v1220
    %v1361 = vmul.f32 %v817, %v1230
    %v1362 = vmul.f32 %v818, %v1240
    %v1363 = vmul.f32 %v819, %v1250
    %v1364 = vmul.f32 %v820, %v1260
    %v1365 = vmul.f32 %v821, %v1270
    %v1366 = vmul.f32 %v822, %v1280
    %v1367 = vmul.f32 %v823, %v1290
    %v1368 = vmul.f32 %v824, %v1300
    %v1369 = vmul.f32 %v825, %v1310
    %v1370 = vmul.f32 %v826, %v1320
    %v1371 = vmul.f32 %v827, %v1330
    %v1372 = vmul.f32 %v828, %v1340
    %v1373 = vld [vmem:[#allocation5] sm:$0x1]
    %v1375 = vperm.slane %v1373, 0
    %v1377 = vmul.f32 %v1341, %v1375
    %v1378 = vmul.f32 %v1342, %v1375
    %v1379 = vmul.f32 %v1343, %v1375
    %v1380 = vmul.f32 %v1344, %v1375
    %v1381 = vmul.f32 %v1345, %v1375
    %v1382 = vmul.f32 %v1346, %v1375
    %v1383 = vmul.f32 %v1347, %v1375
    %v1384 = vmul.f32 %v1348, %v1375
    %v1385 = vmul.f32 %v1349, %v1375
    %v1386 = vmul.f32 %v1350, %v1375
    %v1387 = vmul.f32 %v1351, %v1375
    %v1388 = vmul.f32 %v1352, %v1375
    %v1389 = vmul.f32 %v1353, %v1375
    %v1390 = vmul.f32 %v1354, %v1375
    %v1391 = vmul.f32 %v1355, %v1375
    %v1392 = vmul.f32 %v1356, %v1375
    %v1393 = vmul.f32 %v1357, %v1375
    %v1394 = vmul.f32 %v1358, %v1375
    %v1395 = vmul.f32 %v1359, %v1375
    %v1396 = vmul.f32 %v1360, %v1375
    %v1397 = vmul.f32 %v1361, %v1375
    %v1398 = vmul.f32 %v1362, %v1375
    %v1399 = vmul.f32 %v1363, %v1375
    %v1400 = vmul.f32 %v1364, %v1375
    %v1401 = vmul.f32 %v1365, %v1375
    %v1402 = vmul.f32 %v1366, %v1375
    %v1403 = vmul.f32 %v1367, %v1375
    %v1404 = vmul.f32 %v1368, %v1375
    %v1405 = vmul.f32 %v1369, %v1375
    %v1406 = vmul.f32 %v1370, %v1375
    %v1407 = vmul.f32 %v1371, %v1375
    %v1408 = vmul.f32 %v1372, %v1375
    %v1409 = vld [vmem:[%s2] sm:$0x1]
    %v1411 = vperm.slane %v1409, 0
    %v1413 = vadd.f32 %v1377, %v1411
    %v1414 = vadd.f32 %v1378, %v1411
    %v1415 = vadd.f32 %v1379, %v1411
    %v1416 = vadd.f32 %v1380, %v1411
    %v1417 = vadd.f32 %v1381, %v1411
    %v1418 = vadd.f32 %v1382, %v1411
    %v1419 = vadd.f32 %v1383, %v1411
    %v1420 = vadd.f32 %v1384, %v1411
    %v1421 = vadd.f32 %v1385, %v1411
    %v1422 = vadd.f32 %v1386, %v1411
    %v1423 = vadd.f32 %v1387, %v1411
    %v1424 = vadd.f32 %v1388, %v1411
    %v1425 = vadd.f32 %v1389, %v1411
    %v1426 = vadd.f32 %v1390, %v1411
    %v1427 = vadd.f32 %v1391, %v1411
    %v1428 = vadd.f32 %v1392, %v1411
    %v1429 = vadd.f32 %v1393, %v1411
    %v1430 = vadd.f32 %v1394, %v1411
    %v1431 = vadd.f32 %v1395, %v1411
    %v1432 = vadd.f32 %v1396, %v1411
    %v1433 = vadd.f32 %v1397, %v1411
    %v1434 = vadd.f32 %v1398, %v1411
    %v1435 = vadd.f32 %v1399, %v1411
    %v1436 = vadd.f32 %v1400, %v1411
    %v1437 = vadd.f32 %v1401, %v1411
    %v1438 = vadd.f32 %v1402, %v1411
    %v1439 = vadd.f32 %v1403, %v1411
    %v1440 = vadd.f32 %v1404, %v1411
    %v1441 = vadd.f32 %v1405, %v1411
    %v1442 = vadd.f32 %v1406, %v1411
    %v1443 = vadd.f32 %v1407, %v1411
    %v1444 = vadd.f32 %v1408, %v1411
    %1445 = vst [vmem:[#allocation7] sm:$0xf] %v1413
    %1446 = vst [vmem:[#allocation7 + $0x4] sm:$0xf] %v1414
    %1447 = vst [vmem:[#allocation7 + $0x8] sm:$0xf] %v1415
    %1448 = vst [vmem:[#allocation7 + $0xc] sm:$0xf] %v1416
    %1449 = vst [vmem:[#allocation7 + $0x10] sm:$0xf] %v1417
    %1450 = vst [vmem:[#allocation7 + $0x14] sm:$0xf] %v1418
    %1451 = vst [vmem:[#allocation7 + $0x18] sm:$0xf] %v1419
    %1452 = vst [vmem:[#allocation7 + $0x1c] sm:$0xf] %v1420
    %1453 = vst [vmem:[#allocation7 + $0x20] sm:$0xf] %v1421
    %1454 = vst [vmem:[#allocation7 + $0x24] sm:$0xf] %v1422
    %1455 = vst [vmem:[#allocation7 + $0x28] sm:$0xf] %v1423
    %1456 = vst [vmem:[#allocation7 + $0x2c] sm:$0xf] %v1424
    %1457 = vst [vmem:[#allocation7 + $0x30] sm:$0xf] %v1425
    %1458 = vst [vmem:[#allocation7 + $0x34] sm:$0xf] %v1426
    %1459 = vst [vmem:[#allocation7 + $0x38] sm:$0xf] %v1427
    %1460 = vst [vmem:[#allocation7 + $0x3c] sm:$0xf] %v1428
    %1461 = vst [vmem:[#allocation7 + $0x40] sm:$0xf] %v1429
    %1462 = vst [vmem:[#allocation7 + $0x44] sm:$0xf] %v1430
    %1463 = vst [vmem:[#allocation7 + $0x48] sm:$0xf] %v1431
    %1464 = vst [vmem:[#allocation7 + $0x4c] sm:$0xf] %v1432
    %1465 = vst [vmem:[#allocation7 + $0x50] sm:$0xf] %v1433
    %1466 = vst [vmem:[#allocation7 + $0x54] sm:$0xf] %v1434
    %1467 = vst [vmem:[#allocation7 + $0x58] sm:$0xf] %v1435
    %1468 = vst [vmem:[#allocation7 + $0x5c] sm:$0xf] %v1436
    %1469 = vst [vmem:[#allocation7 + $0x60] sm:$0xf] %v1437
    %1470 = vst [vmem:[#allocation7 + $0x64] sm:$0xf] %v1438
    %1471 = vst [vmem:[#allocation7 + $0x68] sm:$0xf] %v1439
    %1472 = vst [vmem:[#allocation7 + $0x6c] sm:$0xf] %v1440
    %1473 = vst [vmem:[#allocation7 + $0x70] sm:$0xf] %v1441
    %1474 = vst [vmem:[#allocation7 + $0x74] sm:$0xf] %v1442
    %1475 = vst [vmem:[#allocation7 + $0x78] sm:$0xf] %v1443
    %1476 = vst [vmem:[#allocation7 + $0x7c] sm:$0xf] %v1444
    // Predicated region
    $region22: #{tpu_custom_call.1} parent=1 // pred_check
      _
    $region23: #{tpu_custom_call.1} parent=1 // pred_check_branch
      %1478 = sbr.rel (0) target = $region25
    $region24: #{tpu_custom_call.1} parent=1 // pred_region
      %1480 = vsyncadd [#allocation4], 0
      %s1481 = sshll.u32 [#allocation7], 4
      %s1482 = int_to_ptr.vmem [resolvable:$true] %s1481
      %s1483 = sshll.u32 %s3, 4
      %s1484 = int_to_ptr.hbm [resolvable:$true] %s1483
      %1489 = dma.vmem_to_hbm [thread:$0]  %s1482, 2048, %s1484, [#allocation4], 64, 64, 4
    $region25: #{tpu_custom_call.1} parent=1 // pred_fallthru
      _
    // Predicated region
    $region26: #{tpu_custom_call.1} parent=1 // pred_check
      _
    $region27: #{tpu_custom_call.1} parent=1 // pred_check_branch
      %1491 = sbr.rel (0) target = $region29
    $region28: #{tpu_custom_call.1} parent=1 // pred_region
      %1493 = dma.done [#allocation4], 2048
    $region29: #{tpu_custom_call.1} parent=1 // pred_fallthru
      _
    %1494 = vsyncpa [#allocation3], 1
    %1495 = vsyncpa [#allocation6], 1
    %1496 = vsyncpa [#allocation4], 1

</llo_original>
